<compile_context>
chip_gen: v7x
topology: tpu7x:2x2x1
jax: 0.10.0
libtpu: 0.0.40
codegen_flags: <defaults>
</compile_context>

<pallas_src>
import jax
import jax.numpy as jnp
from jax.experimental import pallas as pl
from jax.experimental.pallas import tpu as pltpu

_LANE = 128


def _cdiv(a, b):
    return (a + b - 1) // b


def _round_up(n, m):
    return _cdiv(n, m) * m


def classifier_kernel(x_ref,
                      w1_ref, b1_ref,
                      w2_ref, b2_ref,
                      w3_ref, b3_ref,
                      w4_ref, b4_ref,
                      o_ref):
    # Cast the f32 x tile to bf16 in-kernel (cheap VPU work hidden under MXU).
    x = x_ref[...].astype(jnp.bfloat16)

    # layer_1 (+ folded batchnorm1) -> relu
    h = jnp.dot(x, w1_ref[...], preferred_element_type=jnp.float32) + b1_ref[...]
    h = jnp.maximum(h, 0.0)

    # layer_2 (+ folded batchnorm2) -> relu -> dropout(eval: identity)
    h = jnp.dot(h.astype(jnp.bfloat16), w2_ref[...],
                preferred_element_type=jnp.float32) + b2_ref[...]
    h = jnp.maximum(h, 0.0)

    # layer_3 (+ folded batchnorm3) -> relu -> dropout(eval: identity)
    h = jnp.dot(h.astype(jnp.bfloat16), w3_ref[...],
                preferred_element_type=jnp.float32) + b3_ref[...]
    h = jnp.maximum(h, 0.0)                                  # (tile_b, 32) f32

    # layer_4 (32 -> 1) + sigmoid, computed transposed so the batch dimension
    # lands on lanes: VPU multiply + XLU sublane-reduce (off the MXU).  The
    # bias add, sigmoid and the store are all lane-dense.
    ht = h.T                                                 # (32, tile_b) f32
    logits = jnp.sum(ht * w4_ref[...], axis=0, keepdims=True)   # (1, tile_b)
    logits = logits + b4_ref[...]                            # (1,1) broadcast
    o_ref[...] = jax.nn.sigmoid(logits).astype(o_ref.dtype)


def _choose_tile(batch, num_feature):
    """Lane-aligned, VMEM-budgeted batch tile with >=2 grid steps if possible."""
    # Per-row VMEM: double-buffered f32 x block + f32/bf16 intermediates slack.
    bytes_per_row = 2 * 4 * num_feature + 4096
    budget = 24 << 20                      # safe for v5e/v6e/v7x scoped limits
    cap = max(_LANE, min(4096, (budget // bytes_per_row) // _LANE * _LANE))
    num_tiles = _cdiv(batch, cap)
    if num_tiles == 1 and batch > _LANE:   # >=2 steps so both v7x TCs get work
        num_tiles = 2
    tile_b = _round_up(_cdiv(batch, num_tiles), _LANE)
    num_tiles = _cdiv(batch, tile_b)       # tighten: never overshoot by a tile
    return tile_b, num_tiles


def classifier_forward(x, params):
    """x: [B, F] float32. params: dict from init_params (BN already folded)."""
    B, F = x.shape
    w1, b1 = params["w1"], params["b1"]
    w2, b2 = params["w2"], params["b2"]
    w3, b3 = params["w3"], params["b3"]
    w4, b4 = params["w4"], params["b4"]
    weight_args = (w1, b1, w2, b2, w3, b3, w4, b4)
    weight_bytes = sum(a.size * a.dtype.itemsize for a in weight_args)

    tile_b, num_tiles = _choose_tile(B, F)
    padded_b = tile_b * num_tiles
    if padded_b != B:
        x = jnp.pad(x, ((0, padded_b - B), (0, 0)))

    flops = 2 * padded_b * (F * 256 + 256 * 128 + 128 * 32 + 32)
    bytes_accessed = padded_b * F * 4 + weight_bytes + padded_b * 4

    def resident_spec(arr, single_buffer):
        shape = arr.shape
        index_map = lambda i: (0,) * len(shape)
        if single_buffer:
            # Constant index_map -> fetched once; single buffer halves its VMEM.
            return pl.BlockSpec(shape, index_map, pipeline_mode=pl.Buffered(1))
        return pl.BlockSpec(shape, index_map)

    def build(single_buffer_weights):
        vmem_est = (2 * tile_b * F * 4                       # double-buffered x
                    + weight_bytes * (1 if single_buffer_weights else 2)
                    + 2 * tile_b * 4                         # double-buffered out
                    + tile_b * 4096)                         # intermediates slack
        vmem_limit = max(16 << 20, min(vmem_est + (8 << 20), 64 << 20))
        return pl.pallas_call(
            classifier_kernel,
            out_shape=jax.ShapeDtypeStruct((num_tiles, tile_b), jnp.float32),
            grid=(num_tiles,),
            in_specs=[pl.BlockSpec((tile_b, F), lambda i: (i, 0))]
                     + [resident_spec(a, single_buffer_weights)
                        for a in weight_args],
            out_specs=pl.BlockSpec((1, tile_b), lambda i: (i, 0)),
            compiler_params=pltpu.CompilerParams(
                dimension_semantics=("parallel",),
                vmem_limit_bytes=vmem_limit),
            cost_estimate=pl.CostEstimate(
                flops=flops,
                transcendentals=padded_b,            # one sigmoid per row
                bytes_accessed=bytes_accessed),
        )

    try:
        out = build(hasattr(pl, "Buffered"))(x, *weight_args)
    except Exception:
        # Fallback: default double-buffered weight specs (costs a little VMEM).
        out = build(False)(x, *weight_args)

    # (num_tiles, tile_b) lane-dense slab -> [B, 1]; padded rows sliced off.
    return out.reshape(padded_b, 1)[:B]


def _linear_init(key, fan_in, fan_out):
    """PyTorch-style uniform(-1/sqrt(fan_in), 1/sqrt(fan_in)) init.

    Returns weight [fan_in, fan_out] (transposed vs. torch's [out, in]) and
    bias [1, fan_out], both f32.
    """
    kw, kb = jax.random.split(key)
    bound = 1.0 / (fan_in ** 0.5)
    w = jax.random.uniform(kw, (fan_in, fan_out), jnp.float32, -bound, bound)
    b = jax.random.uniform(kb, (1, fan_out), jnp.float32, -bound, bound)
    return w, b


def _bn_fold_into_linear(w, b, gamma, beta, running_mean, running_var, eps=1e-5):
    """Fold eval-mode BatchNorm1d into the preceding linear layer (f32)."""
    scale = gamma / jnp.sqrt(running_var + eps)
    shift = beta - running_mean * scale
    return w * scale[None, :], b * scale[None, :] + shift[None, :]


def init_params(key, num_feature):
    k1, k2, k3, k4 = jax.random.split(key, 4)
    w1, b1 = _linear_init(k1, num_feature, 256)
    w2, b2 = _linear_init(k2, 256, 128)
    w3, b3 = _linear_init(k3, 128, 32)
    w4, b4 = _linear_init(k4, 32, 1)

    # BatchNorm1d init: gamma=1, beta=0, running_mean=0, running_var=1.
    def bn_params(c):
        return (jnp.ones((c,), jnp.float32), jnp.zeros((c,), jnp.float32),
                jnp.zeros((c,), jnp.float32), jnp.ones((c,), jnp.float32))

    w1, b1 = _bn_fold_into_linear(w1, b1, *bn_params(256))
    w2, b2 = _bn_fold_into_linear(w2, b2, *bn_params(128))
    w3, b3 = _bn_fold_into_linear(w3, b3, *bn_params(32))

    # MXU weights in bf16; layer_4 (VPU path) and all biases stay f32.
    return dict(
        w1=w1.astype(jnp.bfloat16), b1=b1,
        w2=w2.astype(jnp.bfloat16), b2=b2,
        w3=w3.astype(jnp.bfloat16), b3=b3,
        w4=w4, b4=b4,
    )


def _reference_forward(x, params):
    """Pure-JAX f32 reference (eval-mode semantics)."""
    h = jnp.maximum(x @ params["w1"].astype(jnp.float32) + params["b1"], 0.0)
    h = jnp.maximum(h @ params["w2"].astype(jnp.float32) + params["b2"], 0.0)
    h = jnp.maximum(h @ params["w3"].astype(jnp.float32) + params["b3"], 0.0)
    return jax.nn.sigmoid(h @ params["w4"] + params["b4"])


if __name__ == "__main__":
    key = jax.random.PRNGKey(0)
    kx, kp = jax.random.split(key)

    B, F = 8, 32  # small batch, num_feature=32
    x = jax.random.normal(kx, (B, F), jnp.float32)
    params = init_params(kp, F)

    out = jax.block_until_ready(classifier_forward(x, params))

    assert out.shape == (B, 1), out.shape
    assert bool(jnp.all(jnp.isfinite(out)))
    assert bool(jnp.all((out >= 0.0) & (out <= 1.0)))  # sigmoid range

    ref = _reference_forward(x, params)
    assert float(jnp.max(jnp.abs(out - ref))) < 5e-2, "mismatch vs f32 reference"
    print("KERNEL_OK")
</pallas_src>

<mosaic_0001>
module attributes {stable_mosaic.version = 11 : i64} {
  func.func @classifier_kernel(%arg0: i32, %arg1: memref<128x32xf32, #tpu.memory_space<vmem>>, %arg2: memref<32x256xbf16, #tpu.memory_space<vmem>>, %arg3: memref<1x256xf32, #tpu.memory_space<vmem>>, %arg4: memref<256x128xbf16, #tpu.memory_space<vmem>>, %arg5: memref<1x128xf32, #tpu.memory_space<vmem>>, %arg6: memref<128x32xbf16, #tpu.memory_space<vmem>>, %arg7: memref<1x32xf32, #tpu.memory_space<vmem>>, %arg8: memref<32x1xf32, #tpu.memory_space<vmem>>, %arg9: memref<1x1xf32, #tpu.memory_space<vmem>>, %arg10: memref<1x128xf32, #tpu.memory_space<vmem>>) attributes {dimension_semantics = [#tpu.dimension_semantics<parallel>], iteration_bounds = array<i64: 1>, scalar_prefetch = 0 : i64, scratch_operands = 0 : i64, tpu.core_type = #tpu.core_type<tc>, window_params = [{transform_indices = @transform_0, window_bounds = array<i64: 128, 32>}, {pipeline_mode = #tpu.pipeline_mode<synchronous>, transform_indices = @transform_1, window_bounds = array<i64: 32, 256>}, {pipeline_mode = #tpu.pipeline_mode<synchronous>, transform_indices = @transform_2, window_bounds = array<i64: 1, 256>}, {pipeline_mode = #tpu.pipeline_mode<synchronous>, transform_indices = @transform_3, window_bounds = array<i64: 256, 128>}, {pipeline_mode = #tpu.pipeline_mode<synchronous>, transform_indices = @transform_4, window_bounds = array<i64: 1, 128>}, {pipeline_mode = #tpu.pipeline_mode<synchronous>, transform_indices = @transform_5, window_bounds = array<i64: 128, 32>}, {pipeline_mode = #tpu.pipeline_mode<synchronous>, transform_indices = @transform_6, window_bounds = array<i64: 1, 32>}, {pipeline_mode = #tpu.pipeline_mode<synchronous>, transform_indices = @transform_7, window_bounds = array<i64: 32, 1>}, {pipeline_mode = #tpu.pipeline_mode<synchronous>, transform_indices = @transform_8, window_bounds = array<i64: 1, 1>}, {transform_indices = @transform_9, window_bounds = array<i64: 1, 128>}]} {
    %c0 = arith.constant 0 : index
    %c0_0 = arith.constant 0 : index
    %0 = vector.load %arg1[%c0, %c0_0] : memref<128x32xf32, #tpu.memory_space<vmem>>, vector<128x32xf32>
    %1 = arith.truncf %0 : vector<128x32xf32> to vector<128x32xbf16>
    %c0_1 = arith.constant 0 : index
    %c0_2 = arith.constant 0 : index
    %2 = vector.load %arg2[%c0_1, %c0_2] : memref<32x256xbf16, #tpu.memory_space<vmem>>, vector<32x256xbf16>
    %cst = arith.constant dense<0.000000e+00> : vector<128x256xf32>
    %3 = tpu.matmul %1, %2, %cst {dimension_numbers = #tpu.dot_dimension_numbers<[1], [0], [0], [1], [0, 0, 1, 1], [], []>} : vector<128x32xbf16>, vector<32x256xbf16>, vector<128x256xf32> -> vector<128x256xf32>
    %c0_3 = arith.constant 0 : index
    %c0_4 = arith.constant 0 : index
    %4 = vector.load %arg3[%c0_3, %c0_4] : memref<1x256xf32, #tpu.memory_space<vmem>>, vector<1x256xf32>
    %5 = vector.broadcast %4 : vector<1x256xf32> to vector<128x256xf32>
    %6 = arith.addf %3, %5 : vector<128x256xf32>
    %cst_5 = arith.constant 0.000000e+00 : f32
    %7 = vector.broadcast %cst_5 : f32 to vector<128x256xf32>
    %8 = arith.maximumf %6, %7 : vector<128x256xf32>
    %9 = arith.truncf %8 : vector<128x256xf32> to vector<128x256xbf16>
    %c0_6 = arith.constant 0 : index
    %c0_7 = arith.constant 0 : index
    %10 = vector.load %arg4[%c0_6, %c0_7] : memref<256x128xbf16, #tpu.memory_space<vmem>>, vector<256x128xbf16>
    %cst_8 = arith.constant dense<0.000000e+00> : vector<128x128xf32>
    %11 = tpu.matmul %9, %10, %cst_8 {dimension_numbers = #tpu.dot_dimension_numbers<[1], [0], [0], [1], [0, 0, 1, 1], [], []>} : vector<128x256xbf16>, vector<256x128xbf16>, vector<128x128xf32> -> vector<128x128xf32>
    %c0_9 = arith.constant 0 : index
    %c0_10 = arith.constant 0 : index
    %12 = vector.load %arg5[%c0_9, %c0_10] : memref<1x128xf32, #tpu.memory_space<vmem>>, vector<1x128xf32>
    %13 = vector.broadcast %12 : vector<1x128xf32> to vector<128x128xf32>
    %14 = arith.addf %11, %13 : vector<128x128xf32>
    %cst_11 = arith.constant 0.000000e+00 : f32
    %15 = vector.broadcast %cst_11 : f32 to vector<128x128xf32>
    %16 = arith.maximumf %14, %15 : vector<128x128xf32>
    %17 = arith.truncf %16 : vector<128x128xf32> to vector<128x128xbf16>
    %c0_12 = arith.constant 0 : index
    %c0_13 = arith.constant 0 : index
    %18 = vector.load %arg6[%c0_12, %c0_13] : memref<128x32xbf16, #tpu.memory_space<vmem>>, vector<128x32xbf16>
    %cst_14 = arith.constant dense<0.000000e+00> : vector<128x32xf32>
    %19 = tpu.matmul %17, %18, %cst_14 {dimension_numbers = #tpu.dot_dimension_numbers<[1], [0], [0], [1], [0, 0, 1, 1], [], []>} : vector<128x128xbf16>, vector<128x32xbf16>, vector<128x32xf32> -> vector<128x32xf32>
    %c0_15 = arith.constant 0 : index
    %c0_16 = arith.constant 0 : index
    %20 = vector.load %arg7[%c0_15, %c0_16] : memref<1x32xf32, #tpu.memory_space<vmem>>, vector<1x32xf32>
    %21 = vector.broadcast %20 : vector<1x32xf32> to vector<128x32xf32>
    %22 = arith.addf %19, %21 : vector<128x32xf32>
    %cst_17 = arith.constant 0.000000e+00 : f32
    %23 = vector.broadcast %cst_17 : f32 to vector<128x32xf32>
    %24 = arith.maximumf %22, %23 : vector<128x32xf32>
    %25 = tpu.transpose %24, [1, 0] : vector<128x32xf32> -> vector<32x128xf32>
    %c0_18 = arith.constant 0 : index
    %c0_19 = arith.constant 0 : index
    %26 = vector.load %arg8[%c0_18, %c0_19] : memref<32x1xf32, #tpu.memory_space<vmem>>, vector<32x1xf32>
    %27 = vector.broadcast %26 : vector<32x1xf32> to vector<32x128xf32>
    %28 = arith.mulf %25, %27 : vector<32x128xf32>
    %cst_20 = arith.constant dense<0.000000e+00> : vector<128xf32>
    %29 = vector.multi_reduction <add>, %28, %cst_20 [0] : vector<32x128xf32> to vector<128xf32>
    %30 = vector.shape_cast %29 : vector<128xf32> to vector<1x128xf32>
    %c0_21 = arith.constant 0 : index
    %c0_22 = arith.constant 0 : index
    %31 = vector.load %arg9[%c0_21, %c0_22] : memref<1x1xf32, #tpu.memory_space<vmem>>, vector<1x1xf32>
    %32 = vector.broadcast %31 : vector<1x1xf32> to vector<1x128xf32>
    %33 = arith.addf %30, %32 : vector<1x128xf32>
    %34 = arith.negf %33 : vector<1x128xf32>
    %35 = math.exp %34 : vector<1x128xf32>
    %cst_23 = arith.constant 1.000000e+00 : f32
    %36 = vector.broadcast %cst_23 : f32 to vector<1x128xf32>
    %37 = arith.addf %36, %35 : vector<1x128xf32>
    %38 = arith.divf %36, %37 : vector<1x128xf32>
    %c0_24 = arith.constant 0 : index
    %c0_25 = arith.constant 0 : index
    %39 = vector.load %arg10[%c0_24, %c0_25] : memref<1x128xf32, #tpu.memory_space<vmem>>, vector<1x128xf32>
    tpu.vector_store %arg10[%c0_24, %c0_25], %38 {strides = array<i32>} : memref<1x128xf32, #tpu.memory_space<vmem>>, vector<1x128xf32>,
    return
  }
  func.func @transform_0(%arg0: i32) -> (i32, i32) {
    %c0_i32 = arith.constant 0 : i32
    %c0_i32_0 = arith.constant 0 : i32
    return %arg0, %c0_i32 : i32, i32
  }
  func.func @transform_1(%arg0: i32) -> (i32, i32) {
    %c0_i32 = arith.constant 0 : i32
    %c0_i32_0 = arith.constant 0 : i32
    %c0_i32_1 = arith.constant 0 : i32
    return %c0_i32, %c0_i32_0 : i32, i32
  }
  func.func @transform_2(%arg0: i32) -> (i32, i32) {
    %c0_i32 = arith.constant 0 : i32
    %c0_i32_0 = arith.constant 0 : i32
    %c0_i32_1 = arith.constant 0 : i32
    return %c0_i32, %c0_i32_0 : i32, i32
  }
  func.func @transform_3(%arg0: i32) -> (i32, i32) {
    %c0_i32 = arith.constant 0 : i32
    %c0_i32_0 = arith.constant 0 : i32
    %c0_i32_1 = arith.constant 0 : i32
    return %c0_i32, %c0_i32_0 : i32, i32
  }
  func.func @transform_4(%arg0: i32) -> (i32, i32) {
    %c0_i32 = arith.constant 0 : i32
    %c0_i32_0 = arith.constant 0 : i32
    %c0_i32_1 = arith.constant 0 : i32
    return %c0_i32, %c0_i32_0 : i32, i32
  }
  func.func @transform_5(%arg0: i32) -> (i32, i32) {
    %c0_i32 = arith.constant 0 : i32
    %c0_i32_0 = arith.constant 0 : i32
    %c0_i32_1 = arith.constant 0 : i32
    return %c0_i32, %c0_i32_0 : i32, i32
  }
  func.func @transform_6(%arg0: i32) -> (i32, i32) {
    %c0_i32 = arith.constant 0 : i32
    %c0_i32_0 = arith.constant 0 : i32
    %c0_i32_1 = arith.constant 0 : i32
    return %c0_i32, %c0_i32_0 : i32, i32
  }
  func.func @transform_7(%arg0: i32) -> (i32, i32) {
    %c0_i32 = arith.constant 0 : i32
    %c0_i32_0 = arith.constant 0 : i32
    %c0_i32_1 = arith.constant 0 : i32
    return %c0_i32, %c0_i32_0 : i32, i32
  }
  func.func @transform_8(%arg0: i32) -> (i32, i32) {
    %c0_i32 = arith.constant 0 : i32
    %c0_i32_0 = arith.constant 0 : i32
    %c0_i32_1 = arith.constant 0 : i32
    return %c0_i32, %c0_i32_0 : i32, i32
  }
  func.func @transform_9(%arg0: i32) -> (i32, i32) {
    %c0_i32 = arith.constant 0 : i32
    %c0_i32_0 = arith.constant 0 : i32
    return %arg0, %c0_i32 : i32, i32
  }
}

module attributes {stable_mosaic.version = 11 : i64} {
  func.func @classifier_kernel(%arg0: i32, %arg1: memref<128x32xf32, #tpu.memory_space<vmem>>, %arg2: memref<32x256xbf16, #tpu.memory_space<vmem>>, %arg3: memref<1x256xf32, #tpu.memory_space<vmem>>, %arg4: memref<256x128xbf16, #tpu.memory_space<vmem>>, %arg5: memref<1x128xf32, #tpu.memory_space<vmem>>, %arg6: memref<128x32xbf16, #tpu.memory_space<vmem>>, %arg7: memref<1x32xf32, #tpu.memory_space<vmem>>, %arg8: memref<32x1xf32, #tpu.memory_space<vmem>>, %arg9: memref<1x1xf32, #tpu.memory_space<vmem>>, %arg10: memref<1x128xf32, #tpu.memory_space<vmem>>) attributes {dimension_semantics = [#tpu.dimension_semantics<parallel>], iteration_bounds = array<i64: 1>, scalar_prefetch = 0 : i64, scratch_operands = 0 : i64, tpu.core_type = #tpu.core_type<tc>, window_params = [{transform_indices = @transform_0, window_bounds = array<i64: 128, 32>}, {pipeline_mode = #tpu.pipeline_mode<synchronous>, transform_indices = @transform_1, window_bounds = array<i64: 32, 256>}, {pipeline_mode = #tpu.pipeline_mode<synchronous>, transform_indices = @transform_2, window_bounds = array<i64: 1, 256>}, {pipeline_mode = #tpu.pipeline_mode<synchronous>, transform_indices = @transform_3, window_bounds = array<i64: 256, 128>}, {pipeline_mode = #tpu.pipeline_mode<synchronous>, transform_indices = @transform_4, window_bounds = array<i64: 1, 128>}, {pipeline_mode = #tpu.pipeline_mode<synchronous>, transform_indices = @transform_5, window_bounds = array<i64: 128, 32>}, {pipeline_mode = #tpu.pipeline_mode<synchronous>, transform_indices = @transform_6, window_bounds = array<i64: 1, 32>}, {pipeline_mode = #tpu.pipeline_mode<synchronous>, transform_indices = @transform_7, window_bounds = array<i64: 32, 1>}, {pipeline_mode = #tpu.pipeline_mode<synchronous>, transform_indices = @transform_8, window_bounds = array<i64: 1, 1>}, {transform_indices = @transform_9, window_bounds = array<i64: 1, 128>}]} {
    %c0 = arith.constant 0 : index
    %c0_0 = arith.constant 0 : index
    %0 = vector.load %arg1[%c0, %c0_0] : memref<128x32xf32, #tpu.memory_space<vmem>>, vector<128x32xf32>
    %1 = arith.truncf %0 : vector<128x32xf32> to vector<128x32xbf16>
    %c0_1 = arith.constant 0 : index
    %c0_2 = arith.constant 0 : index
    %2 = vector.load %arg2[%c0_1, %c0_2] : memref<32x256xbf16, #tpu.memory_space<vmem>>, vector<32x256xbf16>
    %cst = arith.constant dense<0.000000e+00> : vector<128x256xf32>
    %3 = tpu.matmul %1, %2, %cst {dimension_numbers = #tpu.dot_dimension_numbers<[1], [0], [0], [1], [0, 0, 1, 1], [], []>} : vector<128x32xbf16>, vector<32x256xbf16>, vector<128x256xf32> -> vector<128x256xf32>
    %c0_3 = arith.constant 0 : index
    %c0_4 = arith.constant 0 : index
    %4 = vector.load %arg3[%c0_3, %c0_4] : memref<1x256xf32, #tpu.memory_space<vmem>>, vector<1x256xf32>
    %5 = vector.broadcast %4 : vector<1x256xf32> to vector<128x256xf32>
    %6 = arith.addf %3, %5 : vector<128x256xf32>
    %cst_5 = arith.constant 0.000000e+00 : f32
    %7 = vector.broadcast %cst_5 : f32 to vector<128x256xf32>
    %8 = arith.maximumf %6, %7 : vector<128x256xf32>
    %9 = arith.truncf %8 : vector<128x256xf32> to vector<128x256xbf16>
    %c0_6 = arith.constant 0 : index
    %c0_7 = arith.constant 0 : index
    %10 = vector.load %arg4[%c0_6, %c0_7] : memref<256x128xbf16, #tpu.memory_space<vmem>>, vector<256x128xbf16>
    %cst_8 = arith.constant dense<0.000000e+00> : vector<128x128xf32>
    %11 = tpu.matmul %9, %10, %cst_8 {dimension_numbers = #tpu.dot_dimension_numbers<[1], [0], [0], [1], [0, 0, 1, 1], [], []>} : vector<128x256xbf16>, vector<256x128xbf16>, vector<128x128xf32> -> vector<128x128xf32>
    %c0_9 = arith.constant 0 : index
    %c0_10 = arith.constant 0 : index
    %12 = vector.load %arg5[%c0_9, %c0_10] : memref<1x128xf32, #tpu.memory_space<vmem>>, vector<1x128xf32>
    %13 = vector.broadcast %12 : vector<1x128xf32> to vector<128x128xf32>
    %14 = arith.addf %11, %13 : vector<128x128xf32>
    %cst_11 = arith.constant 0.000000e+00 : f32
    %15 = vector.broadcast %cst_11 : f32 to vector<128x128xf32>
    %16 = arith.maximumf %14, %15 : vector<128x128xf32>
    %17 = arith.truncf %16 : vector<128x128xf32> to vector<128x128xbf16>
    %c0_12 = arith.constant 0 : index
    %c0_13 = arith.constant 0 : index
    %18 = vector.load %arg6[%c0_12, %c0_13] : memref<128x32xbf16, #tpu.memory_space<vmem>>, vector<128x32xbf16>
    %cst_14 = arith.constant dense<0.000000e+00> : vector<128x32xf32>
    %19 = tpu.matmul %17, %18, %cst_14 {dimension_numbers = #tpu.dot_dimension_numbers<[1], [0], [0], [1], [0, 0, 1, 1], [], []>} : vector<128x128xbf16>, vector<128x32xbf16>, vector<128x32xf32> -> vector<128x32xf32>
    %c0_15 = arith.constant 0 : index
    %c0_16 = arith.constant 0 : index
    %20 = vector.load %arg7[%c0_15, %c0_16] : memref<1x32xf32, #tpu.memory_space<vmem>>, vector<1x32xf32>
    %21 = vector.broadcast %20 : vector<1x32xf32> to vector<128x32xf32>
    %22 = arith.addf %19, %21 : vector<128x32xf32>
    %cst_17 = arith.constant 0.000000e+00 : f32
    %23 = vector.broadcast %cst_17 : f32 to vector<128x32xf32>
    %24 = arith.maximumf %22, %23 : vector<128x32xf32>
    %25 = tpu.transpose %24, [1, 0] : vector<128x32xf32> -> vector<32x128xf32>
    %c0_18 = arith.constant 0 : index
    %c0_19 = arith.constant 0 : index
    %26 = vector.load %arg8[%c0_18, %c0_19] : memref<32x1xf32, #tpu.memory_space<vmem>>, vector<32x1xf32>
    %27 = vector.broadcast %26 : vector<32x1xf32> to vector<32x128xf32>
    %28 = arith.mulf %25, %27 : vector<32x128xf32>
    %cst_20 = arith.constant dense<0.000000e+00> : vector<128xf32>
    %29 = vector.multi_reduction <add>, %28, %cst_20 [0] : vector<32x128xf32> to vector<128xf32>
    %30 = vector.shape_cast %29 : vector<128xf32> to vector<1x128xf32>
    %c0_21 = arith.constant 0 : index
    %c0_22 = arith.constant 0 : index
    %31 = vector.load %arg9[%c0_21, %c0_22] : memref<1x1xf32, #tpu.memory_space<vmem>>, vector<1x1xf32>
    %32 = vector.broadcast %31 : vector<1x1xf32> to vector<1x128xf32>
    %33 = arith.addf %30, %32 : vector<1x128xf32>
    %34 = arith.negf %33 : vector<1x128xf32>
    %35 = math.exp %34 : vector<1x128xf32>
    %cst_23 = arith.constant 1.000000e+00 : f32
    %36 = vector.broadcast %cst_23 : f32 to vector<1x128xf32>
    %37 = arith.addf %36, %35 : vector<1x128xf32>
    %38 = arith.divf %36, %37 : vector<1x128xf32>
    %c0_24 = arith.constant 0 : index
    %c0_25 = arith.constant 0 : index
    %39 = vector.load %arg10[%c0_24, %c0_25] : memref<1x128xf32, #tpu.memory_space<vmem>>, vector<1x128xf32>
    tpu.vector_store %arg10[%c0_24, %c0_25], %38 {strides = array<i32>} : memref<1x128xf32, #tpu.memory_space<vmem>>, vector<1x128xf32>,
    return
  }
  func.func @transform_0(%arg0: i32) -> (i32, i32) {
    %c0_i32 = arith.constant 0 : i32
    %c0_i32_0 = arith.constant 0 : i32
    return %arg0, %c0_i32 : i32, i32
  }
  func.func @transform_1(%arg0: i32) -> (i32, i32) {
    %c0_i32 = arith.constant 0 : i32
    %c0_i32_0 = arith.constant 0 : i32
    %c0_i32_1 = arith.constant 0 : i32
    return %c0_i32, %c0_i32_0 : i32, i32
  }
  func.func @transform_2(%arg0: i32) -> (i32, i32) {
    %c0_i32 = arith.constant 0 : i32
    %c0_i32_0 = arith.constant 0 : i32
    %c0_i32_1 = arith.constant 0 : i32
    return %c0_i32, %c0_i32_0 : i32, i32
  }
  func.func @transform_3(%arg0: i32) -> (i32, i32) {
    %c0_i32 = arith.constant 0 : i32
    %c0_i32_0 = arith.constant 0 : i32
    %c0_i32_1 = arith.constant 0 : i32
    return %c0_i32, %c0_i32_0 : i32, i32
  }
  func.func @transform_4(%arg0: i32) -> (i32, i32) {
    %c0_i32 = arith.constant 0 : i32
    %c0_i32_0 = arith.constant 0 : i32
    %c0_i32_1 = arith.constant 0 : i32
    return %c0_i32, %c0_i32_0 : i32, i32
  }
  func.func @transform_5(%arg0: i32) -> (i32, i32) {
    %c0_i32 = arith.constant 0 : i32
    %c0_i32_0 = arith.constant 0 : i32
    %c0_i32_1 = arith.constant 0 : i32
    return %c0_i32, %c0_i32_0 : i32, i32
  }
  func.func @transform_6(%arg0: i32) -> (i32, i32) {
    %c0_i32 = arith.constant 0 : i32
    %c0_i32_0 = arith.constant 0 : i32
    %c0_i32_1 = arith.constant 0 : i32
    return %c0_i32, %c0_i32_0 : i32, i32
  }
  func.func @transform_7(%arg0: i32) -> (i32, i32) {
    %c0_i32 = arith.constant 0 : i32
    %c0_i32_0 = arith.constant 0 : i32
    %c0_i32_1 = arith.constant 0 : i32
    return %c0_i32, %c0_i32_0 : i32, i32
  }
  func.func @transform_8(%arg0: i32) -> (i32, i32) {
    %c0_i32 = arith.constant 0 : i32
    %c0_i32_0 = arith.constant 0 : i32
    %c0_i32_1 = arith.constant 0 : i32
    return %c0_i32, %c0_i32_0 : i32, i32
  }
  func.func @transform_9(%arg0: i32) -> (i32, i32) {
    %c0_i32 = arith.constant 0 : i32
    %c0_i32_0 = arith.constant 0 : i32
    return %arg0, %c0_i32 : i32, i32
  }
}

</mosaic_0001>

<llo_original>
// kernel: tpu_custom_call.1
$region0: #{tpu_custom_call.1}
  #allocation0 [shape = 'u32[]', space=smem, size = 0x4, offset = 0x4, fixed_abs, tag = 'smem constant byte address 0x4 - core index']
  #allocation1 [shape = 'u32[144,128]{1,0:T(1,128)}', space=vmem, size = 0x12000, scoped, tag = 'internal scratch']
  #allocation2 [shape = 'f32[1,1]{1,0:T(1,128)S(1)}', space=vmem, size = 0x200, scoped, tag = 'scoped memory for tpu_custom_call.1']
  %s0 = inlined_call_operand.vmem [shape: f32[128,32], index: 0, kind: input, shape index: {}]
  %s1 = inlined_call_operand.vmem [shape: bf16[32,256], index: 1, kind: input, shape index: {}]
  %s2 = inlined_call_operand.vmem [shape: f32[1,256], index: 2, kind: input, shape index: {}]
  %s3 = inlined_call_operand.vmem [shape: bf16[256,128], index: 3, kind: input, shape index: {}]
  %s4 = inlined_call_operand.vmem [shape: f32[1,128], index: 4, kind: input, shape index: {}]
  %s5 = inlined_call_operand.vmem [shape: bf16[128,32], index: 5, kind: input, shape index: {}]
  %s6 = inlined_call_operand.vmem [shape: f32[1,32], index: 6, kind: input, shape index: {}]
  %s7 = inlined_call_operand.vmem [shape: f32[32,1], index: 7, kind: input, shape index: {}]
  %s8 = inlined_call_operand.<no memory space> [shape: f32[1,1], index: 8, kind: input, shape index: {}]
  %s9 = inlined_call_operand.hbm [shape: f32[1,128], index: 9, kind: output, shape index: {}]
  %s10 = sld [smem:[#allocation0]]
  $region46: #{tpu_custom_call.1} parent=0
    _
  %s12 = ssub.s32 1, %s10
  %s13 = scalar_select 0, %s12, %s10
  %v14 = vstv %s8
  %15 = vst [vmem:[#allocation2] sm:$0x1] %v14
  $region1: #{tpu_custom_call.1} parent=0
    #allocation3 [shape = 'u8[512]{0}', space=vmem, size = 0x400, scoped, tag = 'output window, operand 0, single buffered']
    #allocation4 [shape = 's32[1]{0}', space=sflag, size = 0x4, scoped, tag = 'scoped memory for tpu_custom_call.1']
    %16 = vsyncpa [#allocation4], 0
    // Predicated region
    $region2: #{tpu_custom_call.1} parent=1 // pred_check
      _
    $region3: #{tpu_custom_call.1} parent=1 // pred_check_branch
      %18 = sbr.rel (0) target = $region5
    $region4: #{tpu_custom_call.1} parent=1 // pred_region
      _
    $region5: #{tpu_custom_call.1} parent=1 // pred_fallthru
      _
    // Predicated region
    $region6: #{tpu_custom_call.1} parent=1 // pred_check
      _
    $region7: #{tpu_custom_call.1} parent=1 // pred_check_branch
      %20 = sbr.rel (0) target = $region9
    $region8: #{tpu_custom_call.1} parent=1 // pred_region
      _
    $region9: #{tpu_custom_call.1} parent=1 // pred_fallthru
      _
    // Predicated region
    $region10: #{tpu_custom_call.1} parent=1 // pred_check
      _
    $region11: #{tpu_custom_call.1} parent=1 // pred_check_branch
      %22 = sbr.rel (0) target = $region13
    $region12: #{tpu_custom_call.1} parent=1 // pred_region
      _
    $region13: #{tpu_custom_call.1} parent=1 // pred_fallthru
      _
    // Predicated region
    $region14: #{tpu_custom_call.1} parent=1 // pred_check
      _
    $region15: #{tpu_custom_call.1} parent=1 // pred_check_branch
      %24 = sbr.rel (0) target = $region17
    $region16: #{tpu_custom_call.1} parent=1 // pred_region
      _
    $region17: #{tpu_custom_call.1} parent=1 // pred_fallthru
      _
    // Predicated region
    $region18: #{tpu_custom_call.1} parent=1 // pred_check
      _
    $region19: #{tpu_custom_call.1} parent=1 // pred_check_branch
      %26 = sbr.rel (0) target = $region21
    $region20: #{tpu_custom_call.1} parent=1 // pred_region
      _
    $region21: #{tpu_custom_call.1} parent=1 // pred_fallthru
      _
    // Predicated region
    $region22: #{tpu_custom_call.1} parent=1 // pred_check
      _
    $region23: #{tpu_custom_call.1} parent=1 // pred_check_branch
      %28 = sbr.rel (0) target = $region25
    $region24: #{tpu_custom_call.1} parent=1 // pred_region
      _
    $region25: #{tpu_custom_call.1} parent=1 // pred_fallthru
      _
    // Predicated region
    $region26: #{tpu_custom_call.1} parent=1 // pred_check
      _
    $region27: #{tpu_custom_call.1} parent=1 // pred_check_branch
      %30 = sbr.rel (0) target = $region29
    $region28: #{tpu_custom_call.1} parent=1 // pred_region
      _
    $region29: #{tpu_custom_call.1} parent=1 // pred_fallthru
      _
    // Predicated region
    $region30: #{tpu_custom_call.1} parent=1 // pred_check
      _
    $region31: #{tpu_custom_call.1} parent=1 // pred_check_branch
      %32 = sbr.rel (0) target = $region33
    $region32: #{tpu_custom_call.1} parent=1 // pred_region
      _
    $region33: #{tpu_custom_call.1} parent=1 // pred_fallthru
      _
    // Predicated region
    $region34: #{tpu_custom_call.1} parent=1 // pred_check
      _
    $region35: #{tpu_custom_call.1} parent=1 // pred_check_branch
      %34 = sbr.rel (0) target = $region37
    $region36: #{tpu_custom_call.1} parent=1 // pred_region
      _
    $region37: #{tpu_custom_call.1} parent=1 // pred_fallthru
      _
    %v36 = vld [vmem:[%s0] sm:$0xff]
    %v37 = vld [vmem:[%s0 + $0x8] sm:$0xff]
    %v38 = vld [vmem:[%s0 + $0x10] sm:$0xff]
    %v39 = vld [vmem:[%s0 + $0x18] sm:$0xff]
    %v40 = vld [vmem:[%s0 + $0x20] sm:$0xff]
    %v41 = vld [vmem:[%s0 + $0x28] sm:$0xff]
    %v42 = vld [vmem:[%s0 + $0x30] sm:$0xff]
    %v43 = vld [vmem:[%s0 + $0x38] sm:$0xff]
    %v44 = vld [vmem:[%s0 + $0x40] sm:$0xff]
    %v45 = vld [vmem:[%s0 + $0x48] sm:$0xff]
    %v46 = vld [vmem:[%s0 + $0x50] sm:$0xff]
    %v47 = vld [vmem:[%s0 + $0x58] sm:$0xff]
    %v48 = vld [vmem:[%s0 + $0x60] sm:$0xff]
    %v49 = vld [vmem:[%s0 + $0x68] sm:$0xff]
    %v50 = vld [vmem:[%s0 + $0x70] sm:$0xff]
    %v51 = vld [vmem:[%s0 + $0x78] sm:$0xff]
    %v52 = vpack.c.bf16 %v37, %v36
    %v53 = vpack.c.bf16 %v39, %v38
    %v54 = vpack.c.bf16 %v41, %v40
    %v55 = vpack.c.bf16 %v43, %v42
    %v56 = vpack.c.bf16 %v45, %v44
    %v57 = vpack.c.bf16 %v47, %v46
    %v58 = vpack.c.bf16 %v49, %v48
    %v59 = vpack.c.bf16 %v51, %v50
    %v60 = vld [vmem:[%s1] sm:$0xff]
    %v61 = vld [vmem:[%s1 + $0x8] sm:$0xff]
    %v62 = vld [vmem:[%s1 + $0x10] sm:$0xff]
    %v63 = vld [vmem:[%s1 + $0x18] sm:$0xff]
    %v64 = vld [vmem:[%s2] sm:$0x3]
    %v66 = vlaneseq
    %v67 = vshrl.u32 %v66, 7
    %v68 = vsub.s32 0, %v67
    %v69 = vrot.slane %v64, %v68
    %v70 = vlaneseq
    %v71 = vshrl.u32 %v70, 7
    %v72 = vsub.s32 1, %v71
    %v73 = vrot.slane %v64, %v72
    %v80 = vunpack.c.l.b16 %v60
    %v81 = vunpack.c.h.b16 %v60
    %v82 = vunpack.c.l.b16 %v61
    %v83 = vunpack.c.h.b16 %v61
    %v84 = vunpack.c.l.b16 %v62
    %v85 = vunpack.c.h.b16 %v62
    %v86 = vunpack.c.l.b16 %v63
    %v87 = vunpack.c.h.b16 %v63
    %v88 = vpack.c.b16 %v82, %v80
    %v89 = vpack.c.b16 %v83, %v81
    %v90 = vpack.c.b16 %v86, %v84
    %v91 = vpack.c.b16 %v87, %v85
    %vm96 = vcmask 261120
    %v98 = vsel %vm96, %v52, 0
    %v101 = vsel %vm96, %v53, 0
    %v104 = vsel %vm96, %v54, 0
    %v107 = vsel %vm96, %v55, 0
    %v110 = vsel %vm96, %v56, 0
    %v113 = vsel %vm96, %v57, 0
    %v116 = vsel %vm96, %v58, 0
    %v119 = vsel %vm96, %v59, 0
    %121 = vmatprep.subr.bf16.mxu0 %v89
    %122 = vmatpush1.bf16.msra.mxu0 %v88
    %123 = vmatprep.subr.bf16.mxu0 %v91
    %124 = vmatpush1.bf16.msra.mxu0 %v90
    %125 = vmatprep.subr.bf16.mxu0 0
    %126 = vmatpush1.bf16.msra.mxu0 0
    %127 = vmatprep.subr.bf16.mxu0 0
    %128 = vmatpush1.bf16.msra.mxu0 0
    %129 = vmatprep.subr.bf16.mxu0 0
    %130 = vmatpush1.bf16.msra.mxu0 0
    %131 = vmatprep.subr.bf16.mxu0 0
    %132 = vmatpush1.bf16.msra.mxu0 0
    %133 = vmatprep.subr.bf16.mxu0 0
    %134 = vmatpush1.bf16.msra.mxu0 0
    %135 = vmatprep.subr.bf16.mxu0 0
    %136 = vmatpush1.bf16.msra.mxu0 0
    %137 = vmatprep.subr.bf16.mxu0 0
    %138 = vmatpush1.bf16.msra.mxu0 0
    %139 = vmatprep.subr.bf16.mxu0 0
    %140 = vmatpush1.bf16.msra.mxu0 0
    %141 = vmatprep.subr.bf16.mxu0 0
    %142 = vmatpush1.bf16.msra.mxu0 0
    %143 = vmatprep.subr.bf16.mxu0 0
    %144 = vmatpush1.bf16.msra.mxu0 0
    %145 = vmatprep.subr.bf16.mxu0 0
    %146 = vmatpush1.bf16.msra.mxu0 0
    %147 = vmatprep.subr.bf16.mxu0 0
    %148 = vmatpush1.bf16.msra.mxu0 0
    %149 = vmatprep.subr.bf16.mxu0 0
    %150 = vmatpush1.bf16.msra.mxu0 0
    %151 = vmatprep.subr.bf16.mxu0 0
    %152 = vmatpush1.bf16.msra.mxu0 0
    %153 = vmatprep.mubr.bf16.mxu0 0
    %154 = vmatmul.mubr.bf16.gmra.mrb[0].mxu0 %v98
    %v155 = vpop.f32.mrb[0].mxu0
    %v156 = vadd.f32 %v69, %v155
    %v157 = vpop.f32.mrb[0].mxu0
    %v158 = vadd.f32 %v73, %v157
    %v159 = vpop.f32.mrb[0].mxu0
    %v160 = vadd.f32 %v69, %v159
    %v161 = vpop.f32.mrb[0].mxu0
    %v162 = vadd.f32 %v73, %v161
    %163 = vmatprep.mubr.bf16.mxu0 0
    %164 = vmatmul.mubr.bf16.gmra.mrb[0].mxu0 %v101
    %v165 = vpop.f32.mrb[0].mxu0
    %v166 = vadd.f32 %v69, %v165
    %v167 = vpop.f32.mrb[0].mxu0
    %v168 = vadd.f32 %v73, %v167
    %v169 = vpop.f32.mrb[0].mxu0
    %v170 = vadd.f32 %v69, %v169
    %v171 = vpop.f32.mrb[0].mxu0
    %v172 = vadd.f32 %v73, %v171
    %173 = vmatprep.mubr.bf16.mxu0 0
    %174 = vmatmul.mubr.bf16.gmra.mrb[0].mxu0 %v104
    %v175 = vpop.f32.mrb[0].mxu0
    %v176 = vadd.f32 %v69, %v175
    %v177 = vpop.f32.mrb[0].mxu0
    %v178 = vadd.f32 %v73, %v177
    %v179 = vpop.f32.mrb[0].mxu0
    %v180 = vadd.f32 %v69, %v179
    %v181 = vpop.f32.mrb[0].mxu0
    %v182 = vadd.f32 %v73, %v181
    %183 = vmatprep.mubr.bf16.mxu0 0
    %184 = vmatmul.mubr.bf16.gmra.mrb[0].mxu0 %v107
    %v185 = vpop.f32.mrb[0].mxu0
    %v186 = vadd.f32 %v69, %v185
    %v187 = vpop.f32.mrb[0].mxu0
    %v188 = vadd.f32 %v73, %v187
    %v189 = vpop.f32.mrb[0].mxu0
    %v190 = vadd.f32 %v69, %v189
    %v191 = vpop.f32.mrb[0].mxu0
    %v192 = vadd.f32 %v73, %v191
    %193 = vmatprep.mubr.bf16.mxu0 0
    %194 = vmatmul.mubr.bf16.gmra.mrb[0].mxu0 %v110
    %v195 = vpop.f32.mrb[0].mxu0
    %v196 = vadd.f32 %v69, %v195
    %v197 = vpop.f32.mrb[0].mxu0
    %v198 = vadd.f32 %v73, %v197
    %v199 = vpop.f32.mrb[0].mxu0
    %v200 = vadd.f32 %v69, %v199
    %v201 = vpop.f32.mrb[0].mxu0
    %v202 = vadd.f32 %v73, %v201
    %203 = vmatprep.mubr.bf16.mxu0 0
    %204 = vmatmul.mubr.bf16.gmra.mrb[0].mxu0 %v113
    %v205 = vpop.f32.mrb[0].mxu0
    %v206 = vadd.f32 %v69, %v205
    %v207 = vpop.f32.mrb[0].mxu0
    %v208 = vadd.f32 %v73, %v207
    %v209 = vpop.f32.mrb[0].mxu0
    %v210 = vadd.f32 %v69, %v209
    %v211 = vpop.f32.mrb[0].mxu0
    %v212 = vadd.f32 %v73, %v211
    %213 = vmatprep.mubr.bf16.mxu0 0
    %214 = vmatmul.mubr.bf16.gmra.mrb[0].mxu0 %v116
    %v215 = vpop.f32.mrb[0].mxu0
    %v216 = vadd.f32 %v69, %v215
    %v217 = vpop.f32.mrb[0].mxu0
    %v218 = vadd.f32 %v73, %v217
    %v219 = vpop.f32.mrb[0].mxu0
    %v220 = vadd.f32 %v69, %v219
    %v221 = vpop.f32.mrb[0].mxu0
    %v222 = vadd.f32 %v73, %v221
    %223 = vmatprep.mubr.bf16.mxu0 0
    %224 = vmatmul.mubr.bf16.gmra.mrb[0].mxu0 %v119
    %v225 = vpop.f32.mrb[0].mxu0
    %v226 = vadd.f32 %v69, %v225
    %v227 = vpop.f32.mrb[0].mxu0
    %v228 = vadd.f32 %v73, %v227
    %v229 = vpop.f32.mrb[0].mxu0
    %v230 = vadd.f32 %v69, %v229
    %v231 = vpop.f32.mrb[0].mxu0
    %v232 = vadd.f32 %v73, %v231
    %233 = vdwg.mxu0
    %v234 = vmax.f32 %v156, 0.0
    %v235 = vmax.f32 %v158, 0.0
    %v236 = vmax.f32 %v160, 0.0
    %v237 = vmax.f32 %v162, 0.0
    %v238 = vmax.f32 %v166, 0.0
    %v239 = vmax.f32 %v168, 0.0
    %v240 = vmax.f32 %v170, 0.0
    %v241 = vmax.f32 %v172, 0.0
    %v242 = vmax.f32 %v176, 0.0
    %v243 = vmax.f32 %v178, 0.0
    %v244 = vmax.f32 %v180, 0.0
    %v245 = vmax.f32 %v182, 0.0
    %v246 = vmax.f32 %v186, 0.0
    %v247 = vmax.f32 %v188, 0.0
    %v248 = vmax.f32 %v190, 0.0
    %v249 = vmax.f32 %v192, 0.0
    %v250 = vmax.f32 %v196, 0.0
    %v251 = vmax.f32 %v198, 0.0
    %v252 = vmax.f32 %v200, 0.0
    %v253 = vmax.f32 %v202, 0.0
    %v254 = vmax.f32 %v206, 0.0
    %v255 = vmax.f32 %v208, 0.0
    %v256 = vmax.f32 %v210, 0.0
    %v257 = vmax.f32 %v212, 0.0
    %v258 = vmax.f32 %v216, 0.0
    %v259 = vmax.f32 %v218, 0.0
    %v260 = vmax.f32 %v220, 0.0
    %v261 = vmax.f32 %v222, 0.0
    %v262 = vmax.f32 %v226, 0.0
    %v263 = vmax.f32 %v228, 0.0
    %v264 = vmax.f32 %v230, 0.0
    %v265 = vmax.f32 %v232, 0.0
    %v266 = vpack.c.bf16 %v236, %v234
    %v267 = vpack.c.bf16 %v237, %v235
    %v268 = vpack.c.bf16 %v240, %v238
    %v269 = vpack.c.bf16 %v241, %v239
    %v270 = vpack.c.bf16 %v244, %v242
    %v271 = vpack.c.bf16 %v245, %v243
    %v272 = vpack.c.bf16 %v248, %v246
    %v273 = vpack.c.bf16 %v249, %v247
    %v274 = vpack.c.bf16 %v252, %v250
    %v275 = vpack.c.bf16 %v253, %v251
    %v276 = vpack.c.bf16 %v256, %v254
    %v277 = vpack.c.bf16 %v257, %v255
    %v278 = vpack.c.bf16 %v260, %v258
    %v279 = vpack.c.bf16 %v261, %v259
    %v280 = vpack.c.bf16 %v264, %v262
    %v281 = vpack.c.bf16 %v265, %v263
    %v282 = vld [vmem:[%s3] sm:$0xf]
    %v283 = vld [vmem:[%s3 + $0x4] sm:$0xf]
    %v284 = vld [vmem:[%s3 + $0x8] sm:$0xf]
    %v285 = vld [vmem:[%s3 + $0xc] sm:$0xf]
    %v286 = vld [vmem:[%s3 + $0x10] sm:$0xf]
    %v287 = vld [vmem:[%s3 + $0x14] sm:$0xf]
    %v288 = vld [vmem:[%s3 + $0x18] sm:$0xf]
    %v289 = vld [vmem:[%s3 + $0x1c] sm:$0xf]
    %v290 = vld [vmem:[%s3 + $0x20] sm:$0xf]
    %v291 = vld [vmem:[%s3 + $0x24] sm:$0xf]
    %v292 = vld [vmem:[%s3 + $0x28] sm:$0xf]
    %v293 = vld [vmem:[%s3 + $0x2c] sm:$0xf]
    %v294 = vld [vmem:[%s3 + $0x30] sm:$0xf]
    %v295 = vld [vmem:[%s3 + $0x34] sm:$0xf]
    %v296 = vld [vmem:[%s3 + $0x38] sm:$0xf]
    %v297 = vld [vmem:[%s3 + $0x3c] sm:$0xf]
    %v298 = vld [vmem:[%s3 + $0x40] sm:$0xf]
    %v299 = vld [vmem:[%s3 + $0x44] sm:$0xf]
    %v300 = vld [vmem:[%s3 + $0x48] sm:$0xf]
    %v301 = vld [vmem:[%s3 + $0x4c] sm:$0xf]
    %v302 = vld [vmem:[%s3 + $0x50] sm:$0xf]
    %v303 = vld [vmem:[%s3 + $0x54] sm:$0xf]
    %v304 = vld [vmem:[%s3 + $0x58] sm:$0xf]
    %v305 = vld [vmem:[%s3 + $0x5c] sm:$0xf]
    %v306 = vld [vmem:[%s3 + $0x60] sm:$0xf]
    %v307 = vld [vmem:[%s3 + $0x64] sm:$0xf]
    %v308 = vld [vmem:[%s3 + $0x68] sm:$0xf]
    %v309 = vld [vmem:[%s3 + $0x6c] sm:$0xf]
    %v310 = vld [vmem:[%s3 + $0x70] sm:$0xf]
    %v311 = vld [vmem:[%s3 + $0x74] sm:$0xf]
    %v312 = vld [vmem:[%s3 + $0x78] sm:$0xf]
    %v313 = vld [vmem:[%s3 + $0x7c] sm:$0xf]
    %v314 = vld [vmem:[%s4] sm:$0x1]
    %v316 = vlaneseq
    %v317 = vshrl.u32 %v316, 7
    %v318 = vsub.s32 0, %v317
    %v319 = vrot.slane %v314, %v318
    %v353 = vunpack.c.l.b16 %v282
    %v354 = vunpack.c.l.b16 %v283
    %v355 = vunpack.c.l.b16 %v284
    %v356 = vunpack.c.l.b16 %v285
    %v357 = vunpack.c.l.b16 %v286
    %v358 = vunpack.c.l.b16 %v287
    %v359 = vunpack.c.l.b16 %v288
    %v360 = vunpack.c.l.b16 %v289
    %v361 = vunpack.c.l.b16 %v290
    %v362 = vunpack.c.l.b16 %v291
    %v363 = vunpack.c.l.b16 %v292
    %v364 = vunpack.c.l.b16 %v293
    %v365 = vunpack.c.l.b16 %v294
    %v366 = vunpack.c.l.b16 %v295
    %v367 = vunpack.c.l.b16 %v296
    %v368 = vunpack.c.l.b16 %v297
    %v369 = vunpack.c.l.b16 %v298
    %v370 = vunpack.c.l.b16 %v299
    %v371 = vunpack.c.l.b16 %v300
    %v372 = vunpack.c.l.b16 %v301
    %v373 = vunpack.c.l.b16 %v302
    %v374 = vunpack.c.l.b16 %v303
    %v375 = vunpack.c.l.b16 %v304
    %v376 = vunpack.c.l.b16 %v305
    %v377 = vunpack.c.l.b16 %v306
    %v378 = vunpack.c.l.b16 %v307
    %v379 = vunpack.c.l.b16 %v308
    %v380 = vunpack.c.l.b16 %v309
    %v381 = vunpack.c.l.b16 %v310
    %v382 = vunpack.c.l.b16 %v311
    %v383 = vunpack.c.l.b16 %v312
    %v384 = vunpack.c.l.b16 %v313
    %v385 = vpack.c.b16 %v354, %v353
    %v386 = vpack.c.b16 %v356, %v355
    %v387 = vpack.c.b16 %v358, %v357
    %v388 = vpack.c.b16 %v360, %v359
    %v389 = vpack.c.b16 %v362, %v361
    %v390 = vpack.c.b16 %v364, %v363
    %v391 = vpack.c.b16 %v366, %v365
    %v392 = vpack.c.b16 %v368, %v367
    %v393 = vpack.c.b16 %v370, %v369
    %v394 = vpack.c.b16 %v372, %v371
    %v395 = vpack.c.b16 %v374, %v373
    %v396 = vpack.c.b16 %v376, %v375
    %v397 = vpack.c.b16 %v378, %v377
    %v398 = vpack.c.b16 %v380, %v379
    %v399 = vpack.c.b16 %v382, %v381
    %v400 = vpack.c.b16 %v384, %v383
    %417 = vmatprep.subr.bf16.mxu0 0
    %418 = vmatpush1.bf16.msra.mxu0 %v385
    %419 = vmatprep.subr.bf16.mxu0 0
    %420 = vmatpush1.bf16.msra.mxu0 %v386
    %421 = vmatprep.subr.bf16.mxu0 0
    %422 = vmatpush1.bf16.msra.mxu0 %v387
    %423 = vmatprep.subr.bf16.mxu0 0
    %424 = vmatpush1.bf16.msra.mxu0 %v388
    %425 = vmatprep.subr.bf16.mxu0 0
    %426 = vmatpush1.bf16.msra.mxu0 %v389
    %427 = vmatprep.subr.bf16.mxu0 0
    %428 = vmatpush1.bf16.msra.mxu0 %v390
    %429 = vmatprep.subr.bf16.mxu0 0
    %430 = vmatpush1.bf16.msra.mxu0 %v391
    %431 = vmatprep.subr.bf16.mxu0 0
    %432 = vmatpush1.bf16.msra.mxu0 %v392
    %433 = vmatprep.subr.bf16.mxu0 0
    %434 = vmatpush1.bf16.msra.mxu0 %v393
    %435 = vmatprep.subr.bf16.mxu0 0
    %436 = vmatpush1.bf16.msra.mxu0 %v394
    %437 = vmatprep.subr.bf16.mxu0 0
    %438 = vmatpush1.bf16.msra.mxu0 %v395
    %439 = vmatprep.subr.bf16.mxu0 0
    %440 = vmatpush1.bf16.msra.mxu0 %v396
    %441 = vmatprep.subr.bf16.mxu0 0
    %442 = vmatpush1.bf16.msra.mxu0 %v397
    %443 = vmatprep.subr.bf16.mxu0 0
    %444 = vmatpush1.bf16.msra.mxu0 %v398
    %445 = vmatprep.subr.bf16.mxu0 0
    %446 = vmatpush1.bf16.msra.mxu0 %v399
    %447 = vmatprep.subr.bf16.mxu0 0
    %448 = vmatpush1.bf16.msra.mxu0 %v400
    %449 = vmatprep.mubr.bf16.mxu0 %v267
    %450 = vmatmul.mubr.bf16.gmra.mrb[0].mxu0 %v266
    %v451 = vpop.f32.mrb[0].mxu0
    %v452 = vadd.f32 %v319, %v451
    %v453 = vpop.f32.mrb[0].mxu0
    %v454 = vpop.f32.mrb[0].mxu0
    %v455 = vadd.f32 %v319, %v454
    %v456 = vpop.f32.mrb[0].mxu0
    %457 = vmatprep.mubr.bf16.mxu0 %v269
    %458 = vmatmul.mubr.bf16.gmra.mrb[0].mxu0 %v268
    %v459 = vpop.f32.mrb[0].mxu0
    %v460 = vadd.f32 %v319, %v459
    %v461 = vpop.f32.mrb[0].mxu0
    %v462 = vpop.f32.mrb[0].mxu0
    %v463 = vadd.f32 %v319, %v462
    %v464 = vpop.f32.mrb[0].mxu0
    %465 = vmatprep.mubr.bf16.mxu0 %v271
    %466 = vmatmul.mubr.bf16.gmra.mrb[0].mxu0 %v270
    %v467 = vpop.f32.mrb[0].mxu0
    %v468 = vadd.f32 %v319, %v467
    %v469 = vpop.f32.mrb[0].mxu0
    %v470 = vpop.f32.mrb[0].mxu0
    %v471 = vadd.f32 %v319, %v470
    %v472 = vpop.f32.mrb[0].mxu0
    %473 = vmatprep.mubr.bf16.mxu0 %v273
    %474 = vmatmul.mubr.bf16.gmra.mrb[0].mxu0 %v272
    %v475 = vpop.f32.mrb[0].mxu0
    %v476 = vadd.f32 %v319, %v475
    %v477 = vpop.f32.mrb[0].mxu0
    %v478 = vpop.f32.mrb[0].mxu0
    %v479 = vadd.f32 %v319, %v478
    %v480 = vpop.f32.mrb[0].mxu0
    %481 = vmatprep.mubr.bf16.mxu0 %v275
    %482 = vmatmul.mubr.bf16.gmra.mrb[0].mxu0 %v274
    %v483 = vpop.f32.mrb[0].mxu0
    %v484 = vadd.f32 %v319, %v483
    %v485 = vpop.f32.mrb[0].mxu0
    %v486 = vpop.f32.mrb[0].mxu0
    %v487 = vadd.f32 %v319, %v486
    %v488 = vpop.f32.mrb[0].mxu0
    %489 = vmatprep.mubr.bf16.mxu0 %v277
    %490 = vmatmul.mubr.bf16.gmra.mrb[0].mxu0 %v276
    %v491 = vpop.f32.mrb[0].mxu0
    %v492 = vadd.f32 %v319, %v491
    %v493 = vpop.f32.mrb[0].mxu0
    %v494 = vpop.f32.mrb[0].mxu0
    %v495 = vadd.f32 %v319, %v494
    %v496 = vpop.f32.mrb[0].mxu0
    %497 = vmatprep.mubr.bf16.mxu0 %v279
    %498 = vmatmul.mubr.bf16.gmra.mrb[0].mxu0 %v278
    %v499 = vpop.f32.mrb[0].mxu0
    %v500 = vadd.f32 %v319, %v499
    %v501 = vpop.f32.mrb[0].mxu0
    %v502 = vpop.f32.mrb[0].mxu0
    %v503 = vadd.f32 %v319, %v502
    %v504 = vpop.f32.mrb[0].mxu0
    %505 = vmatprep.mubr.bf16.mxu0 %v281
    %506 = vmatmul.mubr.bf16.gmra.mrb[0].mxu0 %v280
    %v507 = vpop.f32.mrb[0].mxu0
    %v508 = vadd.f32 %v319, %v507
    %v509 = vpop.f32.mrb[0].mxu0
    %v510 = vpop.f32.mrb[0].mxu0
    %v511 = vadd.f32 %v319, %v510
    %v512 = vpop.f32.mrb[0].mxu0
    %513 = vdwg.mxu0
    %v514 = vmax.f32 %v452, 0.0
    %v515 = vmax.f32 %v455, 0.0
    %v516 = vmax.f32 %v460, 0.0
    %v517 = vmax.f32 %v463, 0.0
    %v518 = vmax.f32 %v468, 0.0
    %v519 = vmax.f32 %v471, 0.0
    %v520 = vmax.f32 %v476, 0.0
    %v521 = vmax.f32 %v479, 0.0
    %v522 = vmax.f32 %v484, 0.0
    %v523 = vmax.f32 %v487, 0.0
    %v524 = vmax.f32 %v492, 0.0
    %v525 = vmax.f32 %v495, 0.0
    %v526 = vmax.f32 %v500, 0.0
    %v527 = vmax.f32 %v503, 0.0
    %v528 = vmax.f32 %v508, 0.0
    %v529 = vmax.f32 %v511, 0.0
    %v530 = vpack.c.bf16 %v515, %v514
    %v531 = vpack.c.bf16 %v517, %v516
    %v532 = vpack.c.bf16 %v519, %v518
    %v533 = vpack.c.bf16 %v521, %v520
    %v534 = vpack.c.bf16 %v523, %v522
    %v535 = vpack.c.bf16 %v525, %v524
    %v536 = vpack.c.bf16 %v527, %v526
    %v537 = vpack.c.bf16 %v529, %v528
    %v538 = vld [vmem:[%s5] sm:$0xf]
    %v539 = vld [vmem:[%s5 + $0x4] sm:$0xf]
    %v540 = vld [vmem:[%s5 + $0x8] sm:$0xf]
    %v541 = vld [vmem:[%s5 + $0xc] sm:$0xf]
    %v542 = vld [vmem:[%s5 + $0x10] sm:$0xf]
    %v543 = vld [vmem:[%s5 + $0x14] sm:$0xf]
    %v544 = vld [vmem:[%s5 + $0x18] sm:$0xf]
    %v545 = vld [vmem:[%s5 + $0x1c] sm:$0xf]
    %v546 = vld [vmem:[%s5 + $0x20] sm:$0xf]
    %v547 = vld [vmem:[%s5 + $0x24] sm:$0xf]
    %v548 = vld [vmem:[%s5 + $0x28] sm:$0xf]
    %v549 = vld [vmem:[%s5 + $0x2c] sm:$0xf]
    %v550 = vld [vmem:[%s5 + $0x30] sm:$0xf]
    %v551 = vld [vmem:[%s5 + $0x34] sm:$0xf]
    %v552 = vld [vmem:[%s5 + $0x38] sm:$0xf]
    %v553 = vld [vmem:[%s5 + $0x3c] sm:$0xf]
    %v554 = vld [vmem:[%s6] sm:$0x1]
    %v556 = vlaneseq
    %v557 = vshrl.u32 %v556, 7
    %v558 = vsub.s32 0, %v557
    %v559 = vrot.slane %v554, %v558
    %v577 = vunpack.c.l.b16 %v538
    %v578 = vunpack.c.l.b16 %v539
    %v579 = vunpack.c.l.b16 %v540
    %v580 = vunpack.c.l.b16 %v541
    %v581 = vunpack.c.l.b16 %v542
    %v582 = vunpack.c.l.b16 %v543
    %v583 = vunpack.c.l.b16 %v544
    %v584 = vunpack.c.l.b16 %v545
    %v585 = vunpack.c.l.b16 %v546
    %v586 = vunpack.c.l.b16 %v547
    %v587 = vunpack.c.l.b16 %v548
    %v588 = vunpack.c.l.b16 %v549
    %v589 = vunpack.c.l.b16 %v550
    %v590 = vunpack.c.l.b16 %v551
    %v591 = vunpack.c.l.b16 %v552
    %v592 = vunpack.c.l.b16 %v553
    %v593 = vpack.c.b16 %v578, %v577
    %v594 = vpack.c.b16 %v580, %v579
    %v595 = vpack.c.b16 %v582, %v581
    %v596 = vpack.c.b16 %v584, %v583
    %v597 = vpack.c.b16 %v586, %v585
    %v598 = vpack.c.b16 %v588, %v587
    %v599 = vpack.c.b16 %v590, %v589
    %v600 = vpack.c.b16 %v592, %v591
    %609 = vmatprep.subr.bf16.mxu0 0
    %610 = vmatpush1.bf16.msra.mxu0 %v593
    %611 = vmatprep.subr.bf16.mxu0 0
    %612 = vmatpush1.bf16.msra.mxu0 %v594
    %613 = vmatprep.subr.bf16.mxu0 0
    %614 = vmatpush1.bf16.msra.mxu0 %v595
    %615 = vmatprep.subr.bf16.mxu0 0
    %616 = vmatpush1.bf16.msra.mxu0 %v596
    %617 = vmatprep.subr.bf16.mxu0 0
    %618 = vmatpush1.bf16.msra.mxu0 %v597
    %619 = vmatprep.subr.bf16.mxu0 0
    %620 = vmatpush1.bf16.msra.mxu0 %v598
    %621 = vmatprep.subr.bf16.mxu0 0
    %622 = vmatpush1.bf16.msra.mxu0 %v599
    %623 = vmatprep.subr.bf16.mxu0 0
    %624 = vmatpush1.bf16.msra.mxu0 %v600
    %625 = vmatprep.subr.bf16.mxu0 0
    %626 = vmatpush1.bf16.msra.mxu0 0
    %627 = vmatprep.subr.bf16.mxu0 0
    %628 = vmatpush1.bf16.msra.mxu0 0
    %629 = vmatprep.subr.bf16.mxu0 0
    %630 = vmatpush1.bf16.msra.mxu0 0
    %631 = vmatprep.subr.bf16.mxu0 0
    %632 = vmatpush1.bf16.msra.mxu0 0
    %633 = vmatprep.subr.bf16.mxu0 0
    %634 = vmatpush1.bf16.msra.mxu0 0
    %635 = vmatprep.subr.bf16.mxu0 0
    %636 = vmatpush1.bf16.msra.mxu0 0
    %637 = vmatprep.subr.bf16.mxu0 0
    %638 = vmatpush1.bf16.msra.mxu0 0
    %639 = vmatprep.subr.bf16.mxu0 0
    %640 = vmatpush1.bf16.msra.mxu0 0
    %641 = vmatprep.mubr.bf16.mxu0 0
    %642 = vmatmul.mubr.bf16.gmra.mrb[0].mxu0 %v530
    %v643 = vpop.f32.mrb[0].mxu0
    %v644 = vadd.f32 %v559, %v643
    %v645 = vpop.f32.mrb[0].mxu0
    %v646 = vpop.f32.mrb[0].mxu0
    %v647 = vadd.f32 %v559, %v646
    %v648 = vpop.f32.mrb[0].mxu0
    %649 = vmatprep.mubr.bf16.mxu0 0
    %650 = vmatmul.mubr.bf16.gmra.mrb[0].mxu0 %v531
    %v651 = vpop.f32.mrb[0].mxu0
    %v652 = vadd.f32 %v559, %v651
    %v653 = vpop.f32.mrb[0].mxu0
    %v654 = vpop.f32.mrb[0].mxu0
    %v655 = vadd.f32 %v559, %v654
    %v656 = vpop.f32.mrb[0].mxu0
    %657 = vmatprep.mubr.bf16.mxu0 0
    %658 = vmatmul.mubr.bf16.gmra.mrb[0].mxu0 %v532
    %v659 = vpop.f32.mrb[0].mxu0
    %v660 = vadd.f32 %v559, %v659
    %v661 = vpop.f32.mrb[0].mxu0
    %v662 = vpop.f32.mrb[0].mxu0
    %v663 = vadd.f32 %v559, %v662
    %v664 = vpop.f32.mrb[0].mxu0
    %665 = vmatprep.mubr.bf16.mxu0 0
    %666 = vmatmul.mubr.bf16.gmra.mrb[0].mxu0 %v533
    %v667 = vpop.f32.mrb[0].mxu0
    %v668 = vadd.f32 %v559, %v667
    %v669 = vpop.f32.mrb[0].mxu0
    %v670 = vpop.f32.mrb[0].mxu0
    %v671 = vadd.f32 %v559, %v670
    %v672 = vpop.f32.mrb[0].mxu0
    %673 = vmatprep.mubr.bf16.mxu0 0
    %674 = vmatmul.mubr.bf16.gmra.mrb[0].mxu0 %v534
    %v675 = vpop.f32.mrb[0].mxu0
    %v676 = vadd.f32 %v559, %v675
    %v677 = vpop.f32.mrb[0].mxu0
    %v678 = vpop.f32.mrb[0].mxu0
    %v679 = vadd.f32 %v559, %v678
    %v680 = vpop.f32.mrb[0].mxu0
    %681 = vmatprep.mubr.bf16.mxu0 0
    %682 = vmatmul.mubr.bf16.gmra.mrb[0].mxu0 %v535
    %v683 = vpop.f32.mrb[0].mxu0
    %v684 = vadd.f32 %v559, %v683
    %v685 = vpop.f32.mrb[0].mxu0
    %v686 = vpop.f32.mrb[0].mxu0
    %v687 = vadd.f32 %v559, %v686
    %v688 = vpop.f32.mrb[0].mxu0
    %689 = vmatprep.mubr.bf16.mxu0 0
    %690 = vmatmul.mubr.bf16.gmra.mrb[0].mxu0 %v536
    %v691 = vpop.f32.mrb[0].mxu0
    %v692 = vadd.f32 %v559, %v691
    %v693 = vpop.f32.mrb[0].mxu0
    %v694 = vpop.f32.mrb[0].mxu0
    %v695 = vadd.f32 %v559, %v694
    %v696 = vpop.f32.mrb[0].mxu0
    %697 = vmatprep.mubr.bf16.mxu0 0
    %698 = vmatmul.mubr.bf16.gmra.mrb[0].mxu0 %v537
    %v699 = vpop.f32.mrb[0].mxu0
    %v700 = vadd.f32 %v559, %v699
    %v701 = vpop.f32.mrb[0].mxu0
    %v702 = vpop.f32.mrb[0].mxu0
    %v703 = vadd.f32 %v559, %v702
    %v704 = vpop.f32.mrb[0].mxu0
    %705 = vdwg.mxu0
    %v706 = vmax.f32 %v644, 0.0
    %v707 = vmax.f32 %v647, 0.0
    %v708 = vmax.f32 %v652, 0.0
    %v709 = vmax.f32 %v655, 0.0
    %v710 = vmax.f32 %v660, 0.0
    %v711 = vmax.f32 %v663, 0.0
    %v712 = vmax.f32 %v668, 0.0
    %v713 = vmax.f32 %v671, 0.0
    %v714 = vmax.f32 %v676, 0.0
    %v715 = vmax.f32 %v679, 0.0
    %v716 = vmax.f32 %v684, 0.0
    %v717 = vmax.f32 %v687, 0.0
    %v718 = vmax.f32 %v692, 0.0
    %v719 = vmax.f32 %v695, 0.0
    %v720 = vmax.f32 %v700, 0.0
    %v721 = vmax.f32 %v703, 0.0
    %722 = vxpose.xlu0.b32.start [1/16] %v706, 128
    %723 = vxpose.xlu0.b32.cont [2/16] %v707, 128
    %724 = vxpose.xlu0.b32.cont [3/16] %v708, 128
    %725 = vxpose.xlu0.b32.cont [4/16] %v709, 128
    %726 = vxpose.xlu0.b32.cont [5/16] %v710, 128
    %727 = vxpose.xlu0.b32.cont [6/16] %v711, 128
    %728 = vxpose.xlu0.b32.cont [7/16] %v712, 128
    %729 = vxpose.xlu0.b32.cont [8/16] %v713, 128
    %730 = vxpose.xlu0.b32.cont [9/16] %v714, 128
    %731 = vxpose.xlu0.b32.cont [10/16] %v715, 128
    %732 = vxpose.xlu0.b32.cont [11/16] %v716, 128
    %733 = vxpose.xlu0.b32.cont [12/16] %v717, 128
    %734 = vxpose.xlu0.b32.cont [13/16] %v718, 128
    %735 = vxpose.xlu0.b32.cont [14/16] %v719, 128
    %736 = vxpose.xlu0.b32.cont [15/16] %v720, 128
    %737 = vxpose.xlu0.b32.end [16/16] %v721, 128
    %v738 = vpop.trf.xlu0
    %v739 = vpop.trf.xlu0
    %v740 = vpop.trf.xlu0
    %v741 = vpop.trf.xlu0
    %v742 = vpop.trf.xlu0
    %v743 = vpop.trf.xlu0
    %v744 = vpop.trf.xlu0
    %v745 = vpop.trf.xlu0
    %v746 = vpop.trf.xlu0
    %v747 = vpop.trf.xlu0
    %v748 = vpop.trf.xlu0
    %v749 = vpop.trf.xlu0
    %v750 = vpop.trf.xlu0
    %v751 = vpop.trf.xlu0
    %v752 = vpop.trf.xlu0
    %v753 = vpop.trf.xlu0
    %v754 = vld [vmem:[%s7] sm:$0xff]
    %v755 = vld [vmem:[%s7 + $0x8] sm:$0xff]
    %v756 = vld [vmem:[%s7 + $0x10] sm:$0xff]
    %v757 = vld [vmem:[%s7 + $0x18] sm:$0xff]
    %759 = vset.pattern.permute.xlu0 0
    %760 = vperm.xlu0 %759, %v754
    %v761 = vpop.permute.xlu0 %760
    %764 = vset.pattern.permute.xlu0 0
    %765 = vperm.xlu0 %764, %v755
    %v766 = vpop.permute.xlu0 %765
    %769 = vset.pattern.permute.xlu0 0
    %770 = vperm.xlu0 %769, %v756
    %v771 = vpop.permute.xlu0 %770
    %774 = vset.pattern.permute.xlu0 0
    %775 = vperm.xlu0 %774, %v757
    %v776 = vpop.permute.xlu0 %775
    %v778 = vmul.f32 %v738, %v761
    %v779 = vmul.f32 %v739, %v766
    %v780 = vmul.f32 %v740, %v771
    %v781 = vmul.f32 %v741, %v776
    %v782 = vadd.f32 %v778, %v779
    %v783 = vadd.f32 %v782, %v780
    %v784 = vadd.f32 %v783, %v781
    %v785 = vrot.slane %v784, 4
    %v786 = vadd.f32 %v784, %v785
    %v787 = vrot.slane %v786, 2
    %v788 = vadd.f32 %v786, %v787
    %v789 = vrot.slane %v788, 1
    %v790 = vadd.f32 %v788, %v789
    %v791 = vld [vmem:[#allocation2] sm:$0x1]
    %793 = vset.pattern.permute.xlu0 0
    %794 = vperm.xlu0 %793, %v791
    %v795 = vpop.permute.xlu0 %794
    %v797 = vlaneseq
    %v798 = vshrl.u32 %v797, 7
    %v799 = vsub.s32 0, %v798
    %v800 = vrot.slane %v795, %v799
    %v801 = vadd.f32 %v790, %v800
    %v802 = vxor.u32 %v801, 2147483648
    %v803 = vmul.f32 %v802, 1.442695
    %v804 = vpow.pop %v803
    %v805 = vadd.f32 %v804, 1.0
    %v806 = vrcp.pop %v805
    %v807 = vmul.f32 1.0, %v806
    %808 = vst [vmem:[#allocation3] sm:$0x1] %v807
    // Predicated region
    $region38: #{tpu_custom_call.1} parent=1 // pred_check
      _
    $region39: #{tpu_custom_call.1} parent=1 // pred_check_branch
      %810 = sbr.rel (0) target = $region41
    $region40: #{tpu_custom_call.1} parent=1 // pred_region
      %s812 = ssub.s32 16, 16
      %813 = vsyncadd [#allocation4], %s812
      %s815 = sshll.u32 [#allocation3], 4
      %s816 = int_to_ptr.vmem [resolvable:$true] %s815
      %818 = dma.vmem_to_hbm [thread:$0]  %s816, 16, %s9, [#allocation4]
    $region41: #{tpu_custom_call.1} parent=1 // pred_fallthru
      _
    // Predicated region
    $region42: #{tpu_custom_call.1} parent=1 // pred_check
      _
    $region43: #{tpu_custom_call.1} parent=1 // pred_check_branch
      %820 = sbr.rel (0) target = $region45
    $region44: #{tpu_custom_call.1} parent=1 // pred_region
      %821 = dma.done [#allocation4], 16
    $region45: #{tpu_custom_call.1} parent=1 // pred_fallthru
      _
    %822 = vsyncpa [#allocation4], 1

// kernel: tpu_custom_call.1
$region0: #{tpu_custom_call.1}
  #allocation0 [shape = 'u32[]', space=smem, size = 0x4, offset = 0x4, fixed_abs, tag = 'smem constant byte address 0x4 - core index']
  #allocation1 [shape = 'u32[144,128]{1,0:T(1,128)}', space=vmem, size = 0x12000, scoped, tag = 'internal scratch']
  #allocation2 [shape = 'f32[1,1]{1,0:T(1,128)S(1)}', space=vmem, size = 0x200, scoped, tag = 'scoped memory for tpu_custom_call.1']
  %s0 = inlined_call_operand.vmem [shape: f32[128,32], index: 0, kind: input, shape index: {}]
  %s1 = inlined_call_operand.vmem [shape: bf16[32,256], index: 1, kind: input, shape index: {}]
  %s2 = inlined_call_operand.vmem [shape: f32[1,256], index: 2, kind: input, shape index: {}]
  %s3 = inlined_call_operand.vmem [shape: bf16[256,128], index: 3, kind: input, shape index: {}]
  %s4 = inlined_call_operand.vmem [shape: f32[1,128], index: 4, kind: input, shape index: {}]
  %s5 = inlined_call_operand.vmem [shape: bf16[128,32], index: 5, kind: input, shape index: {}]
  %s6 = inlined_call_operand.vmem [shape: f32[1,32], index: 6, kind: input, shape index: {}]
  %s7 = inlined_call_operand.vmem [shape: f32[32,1], index: 7, kind: input, shape index: {}]
  %s8 = inlined_call_operand.<no memory space> [shape: f32[1,1], index: 8, kind: input, shape index: {}]
  %s9 = inlined_call_operand.hbm [shape: f32[1,128], index: 9, kind: output, shape index: {}]
  %s10 = sld [smem:[#allocation0]]
  $region46: #{tpu_custom_call.1} parent=0
    _
  %s12 = ssub.s32 1, %s10
  %s13 = scalar_select 0, %s12, %s10
  %v14 = vstv %s8
  %15 = vst [vmem:[#allocation2] sm:$0x1] %v14
  $region1: #{tpu_custom_call.1} parent=0
    #allocation3 [shape = 'u8[512]{0}', space=vmem, size = 0x400, scoped, tag = 'output window, operand 0, single buffered']
    #allocation4 [shape = 's32[1]{0}', space=sflag, size = 0x4, scoped, tag = 'scoped memory for tpu_custom_call.1']
    %16 = vsyncpa [#allocation4], 0
    // Predicated region
    $region2: #{tpu_custom_call.1} parent=1 // pred_check
      _
    $region3: #{tpu_custom_call.1} parent=1 // pred_check_branch
      %18 = sbr.rel (0) target = $region5
    $region4: #{tpu_custom_call.1} parent=1 // pred_region
      _
    $region5: #{tpu_custom_call.1} parent=1 // pred_fallthru
      _
    // Predicated region
    $region6: #{tpu_custom_call.1} parent=1 // pred_check
      _
    $region7: #{tpu_custom_call.1} parent=1 // pred_check_branch
      %20 = sbr.rel (0) target = $region9
    $region8: #{tpu_custom_call.1} parent=1 // pred_region
      _
    $region9: #{tpu_custom_call.1} parent=1 // pred_fallthru
      _
    // Predicated region
    $region10: #{tpu_custom_call.1} parent=1 // pred_check
      _
    $region11: #{tpu_custom_call.1} parent=1 // pred_check_branch
      %22 = sbr.rel (0) target = $region13
    $region12: #{tpu_custom_call.1} parent=1 // pred_region
      _
    $region13: #{tpu_custom_call.1} parent=1 // pred_fallthru
      _
    // Predicated region
    $region14: #{tpu_custom_call.1} parent=1 // pred_check
      _
    $region15: #{tpu_custom_call.1} parent=1 // pred_check_branch
      %24 = sbr.rel (0) target = $region17
    $region16: #{tpu_custom_call.1} parent=1 // pred_region
      _
    $region17: #{tpu_custom_call.1} parent=1 // pred_fallthru
      _
    // Predicated region
    $region18: #{tpu_custom_call.1} parent=1 // pred_check
      _
    $region19: #{tpu_custom_call.1} parent=1 // pred_check_branch
      %26 = sbr.rel (0) target = $region21
    $region20: #{tpu_custom_call.1} parent=1 // pred_region
      _
    $region21: #{tpu_custom_call.1} parent=1 // pred_fallthru
      _
    // Predicated region
    $region22: #{tpu_custom_call.1} parent=1 // pred_check
      _
    $region23: #{tpu_custom_call.1} parent=1 // pred_check_branch
      %28 = sbr.rel (0) target = $region25
    $region24: #{tpu_custom_call.1} parent=1 // pred_region
      _
    $region25: #{tpu_custom_call.1} parent=1 // pred_fallthru
      _
    // Predicated region
    $region26: #{tpu_custom_call.1} parent=1 // pred_check
      _
    $region27: #{tpu_custom_call.1} parent=1 // pred_check_branch
      %30 = sbr.rel (0) target = $region29
    $region28: #{tpu_custom_call.1} parent=1 // pred_region
      _
    $region29: #{tpu_custom_call.1} parent=1 // pred_fallthru
      _
    // Predicated region
    $region30: #{tpu_custom_call.1} parent=1 // pred_check
      _
    $region31: #{tpu_custom_call.1} parent=1 // pred_check_branch
      %32 = sbr.rel (0) target = $region33
    $region32: #{tpu_custom_call.1} parent=1 // pred_region
      _
    $region33: #{tpu_custom_call.1} parent=1 // pred_fallthru
      _
    // Predicated region
    $region34: #{tpu_custom_call.1} parent=1 // pred_check
      _
    $region35: #{tpu_custom_call.1} parent=1 // pred_check_branch
      %34 = sbr.rel (0) target = $region37
    $region36: #{tpu_custom_call.1} parent=1 // pred_region
      _
    $region37: #{tpu_custom_call.1} parent=1 // pred_fallthru
      _
    %v36 = vld [vmem:[%s0] sm:$0xff]
    %v37 = vld [vmem:[%s0 + $0x8] sm:$0xff]
    %v38 = vld [vmem:[%s0 + $0x10] sm:$0xff]
    %v39 = vld [vmem:[%s0 + $0x18] sm:$0xff]
    %v40 = vld [vmem:[%s0 + $0x20] sm:$0xff]
    %v41 = vld [vmem:[%s0 + $0x28] sm:$0xff]
    %v42 = vld [vmem:[%s0 + $0x30] sm:$0xff]
    %v43 = vld [vmem:[%s0 + $0x38] sm:$0xff]
    %v44 = vld [vmem:[%s0 + $0x40] sm:$0xff]
    %v45 = vld [vmem:[%s0 + $0x48] sm:$0xff]
    %v46 = vld [vmem:[%s0 + $0x50] sm:$0xff]
    %v47 = vld [vmem:[%s0 + $0x58] sm:$0xff]
    %v48 = vld [vmem:[%s0 + $0x60] sm:$0xff]
    %v49 = vld [vmem:[%s0 + $0x68] sm:$0xff]
    %v50 = vld [vmem:[%s0 + $0x70] sm:$0xff]
    %v51 = vld [vmem:[%s0 + $0x78] sm:$0xff]
    %v52 = vpack.c.bf16 %v37, %v36
    %v53 = vpack.c.bf16 %v39, %v38
    %v54 = vpack.c.bf16 %v41, %v40
    %v55 = vpack.c.bf16 %v43, %v42
    %v56 = vpack.c.bf16 %v45, %v44
    %v57 = vpack.c.bf16 %v47, %v46
    %v58 = vpack.c.bf16 %v49, %v48
    %v59 = vpack.c.bf16 %v51, %v50
    %v60 = vld [vmem:[%s1] sm:$0xff]
    %v61 = vld [vmem:[%s1 + $0x8] sm:$0xff]
    %v62 = vld [vmem:[%s1 + $0x10] sm:$0xff]
    %v63 = vld [vmem:[%s1 + $0x18] sm:$0xff]
    %v64 = vld [vmem:[%s2] sm:$0x3]
    %v66 = vlaneseq
    %v67 = vshrl.u32 %v66, 7
    %v68 = vsub.s32 0, %v67
    %v69 = vrot.slane %v64, %v68
    %v70 = vlaneseq
    %v71 = vshrl.u32 %v70, 7
    %v72 = vsub.s32 1, %v71
    %v73 = vrot.slane %v64, %v72
    %v80 = vunpack.c.l.b16 %v60
    %v81 = vunpack.c.h.b16 %v60
    %v82 = vunpack.c.l.b16 %v61
    %v83 = vunpack.c.h.b16 %v61
    %v84 = vunpack.c.l.b16 %v62
    %v85 = vunpack.c.h.b16 %v62
    %v86 = vunpack.c.l.b16 %v63
    %v87 = vunpack.c.h.b16 %v63
    %v88 = vpack.c.b16 %v82, %v80
    %v89 = vpack.c.b16 %v83, %v81
    %v90 = vpack.c.b16 %v86, %v84
    %v91 = vpack.c.b16 %v87, %v85
    %vm96 = vcmask 261120
    %v98 = vsel %vm96, %v52, 0
    %v101 = vsel %vm96, %v53, 0
    %v104 = vsel %vm96, %v54, 0
    %v107 = vsel %vm96, %v55, 0
    %v110 = vsel %vm96, %v56, 0
    %v113 = vsel %vm96, %v57, 0
    %v116 = vsel %vm96, %v58, 0
    %v119 = vsel %vm96, %v59, 0
    %121 = vmatprep.subr.bf16.mxu0 %v89
    %122 = vmatpush1.bf16.msra.mxu0 %v88
    %123 = vmatprep.subr.bf16.mxu0 %v91
    %124 = vmatpush1.bf16.msra.mxu0 %v90
    %125 = vmatprep.subr.bf16.mxu0 0
    %126 = vmatpush1.bf16.msra.mxu0 0
    %127 = vmatprep.subr.bf16.mxu0 0
    %128 = vmatpush1.bf16.msra.mxu0 0
    %129 = vmatprep.subr.bf16.mxu0 0
    %130 = vmatpush1.bf16.msra.mxu0 0
    %131 = vmatprep.subr.bf16.mxu0 0
    %132 = vmatpush1.bf16.msra.mxu0 0
    %133 = vmatprep.subr.bf16.mxu0 0
    %134 = vmatpush1.bf16.msra.mxu0 0
    %135 = vmatprep.subr.bf16.mxu0 0
    %136 = vmatpush1.bf16.msra.mxu0 0
    %137 = vmatprep.subr.bf16.mxu0 0
    %138 = vmatpush1.bf16.msra.mxu0 0
    %139 = vmatprep.subr.bf16.mxu0 0
    %140 = vmatpush1.bf16.msra.mxu0 0
    %141 = vmatprep.subr.bf16.mxu0 0
    %142 = vmatpush1.bf16.msra.mxu0 0
    %143 = vmatprep.subr.bf16.mxu0 0
    %144 = vmatpush1.bf16.msra.mxu0 0
    %145 = vmatprep.subr.bf16.mxu0 0
    %146 = vmatpush1.bf16.msra.mxu0 0
    %147 = vmatprep.subr.bf16.mxu0 0
    %148 = vmatpush1.bf16.msra.mxu0 0
    %149 = vmatprep.subr.bf16.mxu0 0
    %150 = vmatpush1.bf16.msra.mxu0 0
    %151 = vmatprep.subr.bf16.mxu0 0
    %152 = vmatpush1.bf16.msra.mxu0 0
    %153 = vmatprep.mubr.bf16.mxu0 0
    %154 = vmatmul.mubr.bf16.gmra.mrb[0].mxu0 %v98
    %v155 = vpop.f32.mrb[0].mxu0
    %v156 = vadd.f32 %v69, %v155
    %v157 = vpop.f32.mrb[0].mxu0
    %v158 = vadd.f32 %v73, %v157
    %v159 = vpop.f32.mrb[0].mxu0
    %v160 = vadd.f32 %v69, %v159
    %v161 = vpop.f32.mrb[0].mxu0
    %v162 = vadd.f32 %v73, %v161
    %163 = vmatprep.mubr.bf16.mxu0 0
    %164 = vmatmul.mubr.bf16.gmra.mrb[0].mxu0 %v101
    %v165 = vpop.f32.mrb[0].mxu0
    %v166 = vadd.f32 %v69, %v165
    %v167 = vpop.f32.mrb[0].mxu0
    %v168 = vadd.f32 %v73, %v167
    %v169 = vpop.f32.mrb[0].mxu0
    %v170 = vadd.f32 %v69, %v169
    %v171 = vpop.f32.mrb[0].mxu0
    %v172 = vadd.f32 %v73, %v171
    %173 = vmatprep.mubr.bf16.mxu0 0
    %174 = vmatmul.mubr.bf16.gmra.mrb[0].mxu0 %v104
    %v175 = vpop.f32.mrb[0].mxu0
    %v176 = vadd.f32 %v69, %v175
    %v177 = vpop.f32.mrb[0].mxu0
    %v178 = vadd.f32 %v73, %v177
    %v179 = vpop.f32.mrb[0].mxu0
    %v180 = vadd.f32 %v69, %v179
    %v181 = vpop.f32.mrb[0].mxu0
    %v182 = vadd.f32 %v73, %v181
    %183 = vmatprep.mubr.bf16.mxu0 0
    %184 = vmatmul.mubr.bf16.gmra.mrb[0].mxu0 %v107
    %v185 = vpop.f32.mrb[0].mxu0
    %v186 = vadd.f32 %v69, %v185
    %v187 = vpop.f32.mrb[0].mxu0
    %v188 = vadd.f32 %v73, %v187
    %v189 = vpop.f32.mrb[0].mxu0
    %v190 = vadd.f32 %v69, %v189
    %v191 = vpop.f32.mrb[0].mxu0
    %v192 = vadd.f32 %v73, %v191
    %193 = vmatprep.mubr.bf16.mxu0 0
    %194 = vmatmul.mubr.bf16.gmra.mrb[0].mxu0 %v110
    %v195 = vpop.f32.mrb[0].mxu0
    %v196 = vadd.f32 %v69, %v195
    %v197 = vpop.f32.mrb[0].mxu0
    %v198 = vadd.f32 %v73, %v197
    %v199 = vpop.f32.mrb[0].mxu0
    %v200 = vadd.f32 %v69, %v199
    %v201 = vpop.f32.mrb[0].mxu0
    %v202 = vadd.f32 %v73, %v201
    %203 = vmatprep.mubr.bf16.mxu0 0
    %204 = vmatmul.mubr.bf16.gmra.mrb[0].mxu0 %v113
    %v205 = vpop.f32.mrb[0].mxu0
    %v206 = vadd.f32 %v69, %v205
    %v207 = vpop.f32.mrb[0].mxu0
    %v208 = vadd.f32 %v73, %v207
    %v209 = vpop.f32.mrb[0].mxu0
    %v210 = vadd.f32 %v69, %v209
    %v211 = vpop.f32.mrb[0].mxu0
    %v212 = vadd.f32 %v73, %v211
    %213 = vmatprep.mubr.bf16.mxu0 0
    %214 = vmatmul.mubr.bf16.gmra.mrb[0].mxu0 %v116
    %v215 = vpop.f32.mrb[0].mxu0
    %v216 = vadd.f32 %v69, %v215
    %v217 = vpop.f32.mrb[0].mxu0
    %v218 = vadd.f32 %v73, %v217
    %v219 = vpop.f32.mrb[0].mxu0
    %v220 = vadd.f32 %v69, %v219
    %v221 = vpop.f32.mrb[0].mxu0
    %v222 = vadd.f32 %v73, %v221
    %223 = vmatprep.mubr.bf16.mxu0 0
    %224 = vmatmul.mubr.bf16.gmra.mrb[0].mxu0 %v119
    %v225 = vpop.f32.mrb[0].mxu0
    %v226 = vadd.f32 %v69, %v225
    %v227 = vpop.f32.mrb[0].mxu0
    %v228 = vadd.f32 %v73, %v227
    %v229 = vpop.f32.mrb[0].mxu0
    %v230 = vadd.f32 %v69, %v229
    %v231 = vpop.f32.mrb[0].mxu0
    %v232 = vadd.f32 %v73, %v231
    %233 = vdwg.mxu0
    %v234 = vmax.f32 %v156, 0.0
    %v235 = vmax.f32 %v158, 0.0
    %v236 = vmax.f32 %v160, 0.0
    %v237 = vmax.f32 %v162, 0.0
    %v238 = vmax.f32 %v166, 0.0
    %v239 = vmax.f32 %v168, 0.0
    %v240 = vmax.f32 %v170, 0.0
    %v241 = vmax.f32 %v172, 0.0
    %v242 = vmax.f32 %v176, 0.0
    %v243 = vmax.f32 %v178, 0.0
    %v244 = vmax.f32 %v180, 0.0
    %v245 = vmax.f32 %v182, 0.0
    %v246 = vmax.f32 %v186, 0.0
    %v247 = vmax.f32 %v188, 0.0
    %v248 = vmax.f32 %v190, 0.0
    %v249 = vmax.f32 %v192, 0.0
    %v250 = vmax.f32 %v196, 0.0
    %v251 = vmax.f32 %v198, 0.0
    %v252 = vmax.f32 %v200, 0.0
    %v253 = vmax.f32 %v202, 0.0
    %v254 = vmax.f32 %v206, 0.0
    %v255 = vmax.f32 %v208, 0.0
    %v256 = vmax.f32 %v210, 0.0
    %v257 = vmax.f32 %v212, 0.0
    %v258 = vmax.f32 %v216, 0.0
    %v259 = vmax.f32 %v218, 0.0
    %v260 = vmax.f32 %v220, 0.0
    %v261 = vmax.f32 %v222, 0.0
    %v262 = vmax.f32 %v226, 0.0
    %v263 = vmax.f32 %v228, 0.0
    %v264 = vmax.f32 %v230, 0.0
    %v265 = vmax.f32 %v232, 0.0
    %v266 = vpack.c.bf16 %v236, %v234
    %v267 = vpack.c.bf16 %v237, %v235
    %v268 = vpack.c.bf16 %v240, %v238
    %v269 = vpack.c.bf16 %v241, %v239
    %v270 = vpack.c.bf16 %v244, %v242
    %v271 = vpack.c.bf16 %v245, %v243
    %v272 = vpack.c.bf16 %v248, %v246
    %v273 = vpack.c.bf16 %v249, %v247
    %v274 = vpack.c.bf16 %v252, %v250
    %v275 = vpack.c.bf16 %v253, %v251
    %v276 = vpack.c.bf16 %v256, %v254
    %v277 = vpack.c.bf16 %v257, %v255
    %v278 = vpack.c.bf16 %v260, %v258
    %v279 = vpack.c.bf16 %v261, %v259
    %v280 = vpack.c.bf16 %v264, %v262
    %v281 = vpack.c.bf16 %v265, %v263
    %v282 = vld [vmem:[%s3] sm:$0xf]
    %v283 = vld [vmem:[%s3 + $0x4] sm:$0xf]
    %v284 = vld [vmem:[%s3 + $0x8] sm:$0xf]
    %v285 = vld [vmem:[%s3 + $0xc] sm:$0xf]
    %v286 = vld [vmem:[%s3 + $0x10] sm:$0xf]
    %v287 = vld [vmem:[%s3 + $0x14] sm:$0xf]
    %v288 = vld [vmem:[%s3 + $0x18] sm:$0xf]
    %v289 = vld [vmem:[%s3 + $0x1c] sm:$0xf]
    %v290 = vld [vmem:[%s3 + $0x20] sm:$0xf]
    %v291 = vld [vmem:[%s3 + $0x24] sm:$0xf]
    %v292 = vld [vmem:[%s3 + $0x28] sm:$0xf]
    %v293 = vld [vmem:[%s3 + $0x2c] sm:$0xf]
    %v294 = vld [vmem:[%s3 + $0x30] sm:$0xf]
    %v295 = vld [vmem:[%s3 + $0x34] sm:$0xf]
    %v296 = vld [vmem:[%s3 + $0x38] sm:$0xf]
    %v297 = vld [vmem:[%s3 + $0x3c] sm:$0xf]
    %v298 = vld [vmem:[%s3 + $0x40] sm:$0xf]
    %v299 = vld [vmem:[%s3 + $0x44] sm:$0xf]
    %v300 = vld [vmem:[%s3 + $0x48] sm:$0xf]
    %v301 = vld [vmem:[%s3 + $0x4c] sm:$0xf]
    %v302 = vld [vmem:[%s3 + $0x50] sm:$0xf]
    %v303 = vld [vmem:[%s3 + $0x54] sm:$0xf]
    %v304 = vld [vmem:[%s3 + $0x58] sm:$0xf]
    %v305 = vld [vmem:[%s3 + $0x5c] sm:$0xf]
    %v306 = vld [vmem:[%s3 + $0x60] sm:$0xf]
    %v307 = vld [vmem:[%s3 + $0x64] sm:$0xf]
    %v308 = vld [vmem:[%s3 + $0x68] sm:$0xf]
    %v309 = vld [vmem:[%s3 + $0x6c] sm:$0xf]
    %v310 = vld [vmem:[%s3 + $0x70] sm:$0xf]
    %v311 = vld [vmem:[%s3 + $0x74] sm:$0xf]
    %v312 = vld [vmem:[%s3 + $0x78] sm:$0xf]
    %v313 = vld [vmem:[%s3 + $0x7c] sm:$0xf]
    %v314 = vld [vmem:[%s4] sm:$0x1]
    %v316 = vlaneseq
    %v317 = vshrl.u32 %v316, 7
    %v318 = vsub.s32 0, %v317
    %v319 = vrot.slane %v314, %v318
    %v353 = vunpack.c.l.b16 %v282
    %v354 = vunpack.c.l.b16 %v283
    %v355 = vunpack.c.l.b16 %v284
    %v356 = vunpack.c.l.b16 %v285
    %v357 = vunpack.c.l.b16 %v286
    %v358 = vunpack.c.l.b16 %v287
    %v359 = vunpack.c.l.b16 %v288
    %v360 = vunpack.c.l.b16 %v289
    %v361 = vunpack.c.l.b16 %v290
    %v362 = vunpack.c.l.b16 %v291
    %v363 = vunpack.c.l.b16 %v292
    %v364 = vunpack.c.l.b16 %v293
    %v365 = vunpack.c.l.b16 %v294
    %v366 = vunpack.c.l.b16 %v295
    %v367 = vunpack.c.l.b16 %v296
    %v368 = vunpack.c.l.b16 %v297
    %v369 = vunpack.c.l.b16 %v298
    %v370 = vunpack.c.l.b16 %v299
    %v371 = vunpack.c.l.b16 %v300
    %v372 = vunpack.c.l.b16 %v301
    %v373 = vunpack.c.l.b16 %v302
    %v374 = vunpack.c.l.b16 %v303
    %v375 = vunpack.c.l.b16 %v304
    %v376 = vunpack.c.l.b16 %v305
    %v377 = vunpack.c.l.b16 %v306
    %v378 = vunpack.c.l.b16 %v307
    %v379 = vunpack.c.l.b16 %v308
    %v380 = vunpack.c.l.b16 %v309
    %v381 = vunpack.c.l.b16 %v310
    %v382 = vunpack.c.l.b16 %v311
    %v383 = vunpack.c.l.b16 %v312
    %v384 = vunpack.c.l.b16 %v313
    %v385 = vpack.c.b16 %v354, %v353
    %v386 = vpack.c.b16 %v356, %v355
    %v387 = vpack.c.b16 %v358, %v357
    %v388 = vpack.c.b16 %v360, %v359
    %v389 = vpack.c.b16 %v362, %v361
    %v390 = vpack.c.b16 %v364, %v363
    %v391 = vpack.c.b16 %v366, %v365
    %v392 = vpack.c.b16 %v368, %v367
    %v393 = vpack.c.b16 %v370, %v369
    %v394 = vpack.c.b16 %v372, %v371
    %v395 = vpack.c.b16 %v374, %v373
    %v396 = vpack.c.b16 %v376, %v375
    %v397 = vpack.c.b16 %v378, %v377
    %v398 = vpack.c.b16 %v380, %v379
    %v399 = vpack.c.b16 %v382, %v381
    %v400 = vpack.c.b16 %v384, %v383
    %417 = vmatprep.subr.bf16.mxu0 0
    %418 = vmatpush1.bf16.msra.mxu0 %v385
    %419 = vmatprep.subr.bf16.mxu0 0
    %420 = vmatpush1.bf16.msra.mxu0 %v386
    %421 = vmatprep.subr.bf16.mxu0 0
    %422 = vmatpush1.bf16.msra.mxu0 %v387
    %423 = vmatprep.subr.bf16.mxu0 0
    %424 = vmatpush1.bf16.msra.mxu0 %v388
    %425 = vmatprep.subr.bf16.mxu0 0
    %426 = vmatpush1.bf16.msra.mxu0 %v389
    %427 = vmatprep.subr.bf16.mxu0 0
    %428 = vmatpush1.bf16.msra.mxu0 %v390
    %429 = vmatprep.subr.bf16.mxu0 0
    %430 = vmatpush1.bf16.msra.mxu0 %v391
    %431 = vmatprep.subr.bf16.mxu0 0
    %432 = vmatpush1.bf16.msra.mxu0 %v392
    %433 = vmatprep.subr.bf16.mxu0 0
    %434 = vmatpush1.bf16.msra.mxu0 %v393
    %435 = vmatprep.subr.bf16.mxu0 0
    %436 = vmatpush1.bf16.msra.mxu0 %v394
    %437 = vmatprep.subr.bf16.mxu0 0
    %438 = vmatpush1.bf16.msra.mxu0 %v395
    %439 = vmatprep.subr.bf16.mxu0 0
    %440 = vmatpush1.bf16.msra.mxu0 %v396
    %441 = vmatprep.subr.bf16.mxu0 0
    %442 = vmatpush1.bf16.msra.mxu0 %v397
    %443 = vmatprep.subr.bf16.mxu0 0
    %444 = vmatpush1.bf16.msra.mxu0 %v398
    %445 = vmatprep.subr.bf16.mxu0 0
    %446 = vmatpush1.bf16.msra.mxu0 %v399
    %447 = vmatprep.subr.bf16.mxu0 0
    %448 = vmatpush1.bf16.msra.mxu0 %v400
    %449 = vmatprep.mubr.bf16.mxu0 %v267
    %450 = vmatmul.mubr.bf16.gmra.mrb[0].mxu0 %v266
    %v451 = vpop.f32.mrb[0].mxu0
    %v452 = vadd.f32 %v319, %v451
    %v453 = vpop.f32.mrb[0].mxu0
    %v454 = vpop.f32.mrb[0].mxu0
    %v455 = vadd.f32 %v319, %v454
    %v456 = vpop.f32.mrb[0].mxu0
    %457 = vmatprep.mubr.bf16.mxu0 %v269
    %458 = vmatmul.mubr.bf16.gmra.mrb[0].mxu0 %v268
    %v459 = vpop.f32.mrb[0].mxu0
    %v460 = vadd.f32 %v319, %v459
    %v461 = vpop.f32.mrb[0].mxu0
    %v462 = vpop.f32.mrb[0].mxu0
    %v463 = vadd.f32 %v319, %v462
    %v464 = vpop.f32.mrb[0].mxu0
    %465 = vmatprep.mubr.bf16.mxu0 %v271
    %466 = vmatmul.mubr.bf16.gmra.mrb[0].mxu0 %v270
    %v467 = vpop.f32.mrb[0].mxu0
    %v468 = vadd.f32 %v319, %v467
    %v469 = vpop.f32.mrb[0].mxu0
    %v470 = vpop.f32.mrb[0].mxu0
    %v471 = vadd.f32 %v319, %v470
    %v472 = vpop.f32.mrb[0].mxu0
    %473 = vmatprep.mubr.bf16.mxu0 %v273
    %474 = vmatmul.mubr.bf16.gmra.mrb[0].mxu0 %v272
    %v475 = vpop.f32.mrb[0].mxu0
    %v476 = vadd.f32 %v319, %v475
    %v477 = vpop.f32.mrb[0].mxu0
    %v478 = vpop.f32.mrb[0].mxu0
    %v479 = vadd.f32 %v319, %v478
    %v480 = vpop.f32.mrb[0].mxu0
    %481 = vmatprep.mubr.bf16.mxu0 %v275
    %482 = vmatmul.mubr.bf16.gmra.mrb[0].mxu0 %v274
    %v483 = vpop.f32.mrb[0].mxu0
    %v484 = vadd.f32 %v319, %v483
    %v485 = vpop.f32.mrb[0].mxu0
    %v486 = vpop.f32.mrb[0].mxu0
    %v487 = vadd.f32 %v319, %v486
    %v488 = vpop.f32.mrb[0].mxu0
    %489 = vmatprep.mubr.bf16.mxu0 %v277
    %490 = vmatmul.mubr.bf16.gmra.mrb[0].mxu0 %v276
    %v491 = vpop.f32.mrb[0].mxu0
    %v492 = vadd.f32 %v319, %v491
    %v493 = vpop.f32.mrb[0].mxu0
    %v494 = vpop.f32.mrb[0].mxu0
    %v495 = vadd.f32 %v319, %v494
    %v496 = vpop.f32.mrb[0].mxu0
    %497 = vmatprep.mubr.bf16.mxu0 %v279
    %498 = vmatmul.mubr.bf16.gmra.mrb[0].mxu0 %v278
    %v499 = vpop.f32.mrb[0].mxu0
    %v500 = vadd.f32 %v319, %v499
    %v501 = vpop.f32.mrb[0].mxu0
    %v502 = vpop.f32.mrb[0].mxu0
    %v503 = vadd.f32 %v319, %v502
    %v504 = vpop.f32.mrb[0].mxu0
    %505 = vmatprep.mubr.bf16.mxu0 %v281
    %506 = vmatmul.mubr.bf16.gmra.mrb[0].mxu0 %v280
    %v507 = vpop.f32.mrb[0].mxu0
    %v508 = vadd.f32 %v319, %v507
    %v509 = vpop.f32.mrb[0].mxu0
    %v510 = vpop.f32.mrb[0].mxu0
    %v511 = vadd.f32 %v319, %v510
    %v512 = vpop.f32.mrb[0].mxu0
    %513 = vdwg.mxu0
    %v514 = vmax.f32 %v452, 0.0
    %v515 = vmax.f32 %v455, 0.0
    %v516 = vmax.f32 %v460, 0.0
    %v517 = vmax.f32 %v463, 0.0
    %v518 = vmax.f32 %v468, 0.0
    %v519 = vmax.f32 %v471, 0.0
    %v520 = vmax.f32 %v476, 0.0
    %v521 = vmax.f32 %v479, 0.0
    %v522 = vmax.f32 %v484, 0.0
    %v523 = vmax.f32 %v487, 0.0
    %v524 = vmax.f32 %v492, 0.0
    %v525 = vmax.f32 %v495, 0.0
    %v526 = vmax.f32 %v500, 0.0
    %v527 = vmax.f32 %v503, 0.0
    %v528 = vmax.f32 %v508, 0.0
    %v529 = vmax.f32 %v511, 0.0
    %v530 = vpack.c.bf16 %v515, %v514
    %v531 = vpack.c.bf16 %v517, %v516
    %v532 = vpack.c.bf16 %v519, %v518
    %v533 = vpack.c.bf16 %v521, %v520
    %v534 = vpack.c.bf16 %v523, %v522
    %v535 = vpack.c.bf16 %v525, %v524
    %v536 = vpack.c.bf16 %v527, %v526
    %v537 = vpack.c.bf16 %v529, %v528
    %v538 = vld [vmem:[%s5] sm:$0xf]
    %v539 = vld [vmem:[%s5 + $0x4] sm:$0xf]
    %v540 = vld [vmem:[%s5 + $0x8] sm:$0xf]
    %v541 = vld [vmem:[%s5 + $0xc] sm:$0xf]
    %v542 = vld [vmem:[%s5 + $0x10] sm:$0xf]
    %v543 = vld [vmem:[%s5 + $0x14] sm:$0xf]
    %v544 = vld [vmem:[%s5 + $0x18] sm:$0xf]
    %v545 = vld [vmem:[%s5 + $0x1c] sm:$0xf]
    %v546 = vld [vmem:[%s5 + $0x20] sm:$0xf]
    %v547 = vld [vmem:[%s5 + $0x24] sm:$0xf]
    %v548 = vld [vmem:[%s5 + $0x28] sm:$0xf]
    %v549 = vld [vmem:[%s5 + $0x2c] sm:$0xf]
    %v550 = vld [vmem:[%s5 + $0x30] sm:$0xf]
    %v551 = vld [vmem:[%s5 + $0x34] sm:$0xf]
    %v552 = vld [vmem:[%s5 + $0x38] sm:$0xf]
    %v553 = vld [vmem:[%s5 + $0x3c] sm:$0xf]
    %v554 = vld [vmem:[%s6] sm:$0x1]
    %v556 = vlaneseq
    %v557 = vshrl.u32 %v556, 7
    %v558 = vsub.s32 0, %v557
    %v559 = vrot.slane %v554, %v558
    %v577 = vunpack.c.l.b16 %v538
    %v578 = vunpack.c.l.b16 %v539
    %v579 = vunpack.c.l.b16 %v540
    %v580 = vunpack.c.l.b16 %v541
    %v581 = vunpack.c.l.b16 %v542
    %v582 = vunpack.c.l.b16 %v543
    %v583 = vunpack.c.l.b16 %v544
    %v584 = vunpack.c.l.b16 %v545
    %v585 = vunpack.c.l.b16 %v546
    %v586 = vunpack.c.l.b16 %v547
    %v587 = vunpack.c.l.b16 %v548
    %v588 = vunpack.c.l.b16 %v549
    %v589 = vunpack.c.l.b16 %v550
    %v590 = vunpack.c.l.b16 %v551
    %v591 = vunpack.c.l.b16 %v552
    %v592 = vunpack.c.l.b16 %v553
    %v593 = vpack.c.b16 %v578, %v577
    %v594 = vpack.c.b16 %v580, %v579
    %v595 = vpack.c.b16 %v582, %v581
    %v596 = vpack.c.b16 %v584, %v583
    %v597 = vpack.c.b16 %v586, %v585
    %v598 = vpack.c.b16 %v588, %v587
    %v599 = vpack.c.b16 %v590, %v589
    %v600 = vpack.c.b16 %v592, %v591
    %609 = vmatprep.subr.bf16.mxu0 0
    %610 = vmatpush1.bf16.msra.mxu0 %v593
    %611 = vmatprep.subr.bf16.mxu0 0
    %612 = vmatpush1.bf16.msra.mxu0 %v594
    %613 = vmatprep.subr.bf16.mxu0 0
    %614 = vmatpush1.bf16.msra.mxu0 %v595
    %615 = vmatprep.subr.bf16.mxu0 0
    %616 = vmatpush1.bf16.msra.mxu0 %v596
    %617 = vmatprep.subr.bf16.mxu0 0
    %618 = vmatpush1.bf16.msra.mxu0 %v597
    %619 = vmatprep.subr.bf16.mxu0 0
    %620 = vmatpush1.bf16.msra.mxu0 %v598
    %621 = vmatprep.subr.bf16.mxu0 0
    %622 = vmatpush1.bf16.msra.mxu0 %v599
    %623 = vmatprep.subr.bf16.mxu0 0
    %624 = vmatpush1.bf16.msra.mxu0 %v600
    %625 = vmatprep.subr.bf16.mxu0 0
    %626 = vmatpush1.bf16.msra.mxu0 0
    %627 = vmatprep.subr.bf16.mxu0 0
    %628 = vmatpush1.bf16.msra.mxu0 0
    %629 = vmatprep.subr.bf16.mxu0 0
    %630 = vmatpush1.bf16.msra.mxu0 0
    %631 = vmatprep.subr.bf16.mxu0 0
    %632 = vmatpush1.bf16.msra.mxu0 0
    %633 = vmatprep.subr.bf16.mxu0 0
    %634 = vmatpush1.bf16.msra.mxu0 0
    %635 = vmatprep.subr.bf16.mxu0 0
    %636 = vmatpush1.bf16.msra.mxu0 0
    %637 = vmatprep.subr.bf16.mxu0 0
    %638 = vmatpush1.bf16.msra.mxu0 0
    %639 = vmatprep.subr.bf16.mxu0 0
    %640 = vmatpush1.bf16.msra.mxu0 0
    %641 = vmatprep.mubr.bf16.mxu0 0
    %642 = vmatmul.mubr.bf16.gmra.mrb[0].mxu0 %v530
    %v643 = vpop.f32.mrb[0].mxu0
    %v644 = vadd.f32 %v559, %v643
    %v645 = vpop.f32.mrb[0].mxu0
    %v646 = vpop.f32.mrb[0].mxu0
    %v647 = vadd.f32 %v559, %v646
    %v648 = vpop.f32.mrb[0].mxu0
    %649 = vmatprep.mubr.bf16.mxu0 0
    %650 = vmatmul.mubr.bf16.gmra.mrb[0].mxu0 %v531
    %v651 = vpop.f32.mrb[0].mxu0
    %v652 = vadd.f32 %v559, %v651
    %v653 = vpop.f32.mrb[0].mxu0
    %v654 = vpop.f32.mrb[0].mxu0
    %v655 = vadd.f32 %v559, %v654
    %v656 = vpop.f32.mrb[0].mxu0
    %657 = vmatprep.mubr.bf16.mxu0 0
    %658 = vmatmul.mubr.bf16.gmra.mrb[0].mxu0 %v532
    %v659 = vpop.f32.mrb[0].mxu0
    %v660 = vadd.f32 %v559, %v659
    %v661 = vpop.f32.mrb[0].mxu0
    %v662 = vpop.f32.mrb[0].mxu0
    %v663 = vadd.f32 %v559, %v662
    %v664 = vpop.f32.mrb[0].mxu0
    %665 = vmatprep.mubr.bf16.mxu0 0
    %666 = vmatmul.mubr.bf16.gmra.mrb[0].mxu0 %v533
    %v667 = vpop.f32.mrb[0].mxu0
    %v668 = vadd.f32 %v559, %v667
    %v669 = vpop.f32.mrb[0].mxu0
    %v670 = vpop.f32.mrb[0].mxu0
    %v671 = vadd.f32 %v559, %v670
    %v672 = vpop.f32.mrb[0].mxu0
    %673 = vmatprep.mubr.bf16.mxu0 0
    %674 = vmatmul.mubr.bf16.gmra.mrb[0].mxu0 %v534
    %v675 = vpop.f32.mrb[0].mxu0
    %v676 = vadd.f32 %v559, %v675
    %v677 = vpop.f32.mrb[0].mxu0
    %v678 = vpop.f32.mrb[0].mxu0
    %v679 = vadd.f32 %v559, %v678
    %v680 = vpop.f32.mrb[0].mxu0
    %681 = vmatprep.mubr.bf16.mxu0 0
    %682 = vmatmul.mubr.bf16.gmra.mrb[0].mxu0 %v535
    %v683 = vpop.f32.mrb[0].mxu0
    %v684 = vadd.f32 %v559, %v683
    %v685 = vpop.f32.mrb[0].mxu0
    %v686 = vpop.f32.mrb[0].mxu0
    %v687 = vadd.f32 %v559, %v686
    %v688 = vpop.f32.mrb[0].mxu0
    %689 = vmatprep.mubr.bf16.mxu0 0
    %690 = vmatmul.mubr.bf16.gmra.mrb[0].mxu0 %v536
    %v691 = vpop.f32.mrb[0].mxu0
    %v692 = vadd.f32 %v559, %v691
    %v693 = vpop.f32.mrb[0].mxu0
    %v694 = vpop.f32.mrb[0].mxu0
    %v695 = vadd.f32 %v559, %v694
    %v696 = vpop.f32.mrb[0].mxu0
    %697 = vmatprep.mubr.bf16.mxu0 0
    %698 = vmatmul.mubr.bf16.gmra.mrb[0].mxu0 %v537
    %v699 = vpop.f32.mrb[0].mxu0
    %v700 = vadd.f32 %v559, %v699
    %v701 = vpop.f32.mrb[0].mxu0
    %v702 = vpop.f32.mrb[0].mxu0
    %v703 = vadd.f32 %v559, %v702
    %v704 = vpop.f32.mrb[0].mxu0
    %705 = vdwg.mxu0
    %v706 = vmax.f32 %v644, 0.0
    %v707 = vmax.f32 %v647, 0.0
    %v708 = vmax.f32 %v652, 0.0
    %v709 = vmax.f32 %v655, 0.0
    %v710 = vmax.f32 %v660, 0.0
    %v711 = vmax.f32 %v663, 0.0
    %v712 = vmax.f32 %v668, 0.0
    %v713 = vmax.f32 %v671, 0.0
    %v714 = vmax.f32 %v676, 0.0
    %v715 = vmax.f32 %v679, 0.0
    %v716 = vmax.f32 %v684, 0.0
    %v717 = vmax.f32 %v687, 0.0
    %v718 = vmax.f32 %v692, 0.0
    %v719 = vmax.f32 %v695, 0.0
    %v720 = vmax.f32 %v700, 0.0
    %v721 = vmax.f32 %v703, 0.0
    %722 = vxpose.xlu0.b32.start [1/16] %v706, 128
    %723 = vxpose.xlu0.b32.cont [2/16] %v707, 128
    %724 = vxpose.xlu0.b32.cont [3/16] %v708, 128
    %725 = vxpose.xlu0.b32.cont [4/16] %v709, 128
    %726 = vxpose.xlu0.b32.cont [5/16] %v710, 128
    %727 = vxpose.xlu0.b32.cont [6/16] %v711, 128
    %728 = vxpose.xlu0.b32.cont [7/16] %v712, 128
    %729 = vxpose.xlu0.b32.cont [8/16] %v713, 128
    %730 = vxpose.xlu0.b32.cont [9/16] %v714, 128
    %731 = vxpose.xlu0.b32.cont [10/16] %v715, 128
    %732 = vxpose.xlu0.b32.cont [11/16] %v716, 128
    %733 = vxpose.xlu0.b32.cont [12/16] %v717, 128
    %734 = vxpose.xlu0.b32.cont [13/16] %v718, 128
    %735 = vxpose.xlu0.b32.cont [14/16] %v719, 128
    %736 = vxpose.xlu0.b32.cont [15/16] %v720, 128
    %737 = vxpose.xlu0.b32.end [16/16] %v721, 128
    %v738 = vpop.trf.xlu0
    %v739 = vpop.trf.xlu0
    %v740 = vpop.trf.xlu0
    %v741 = vpop.trf.xlu0
    %v742 = vpop.trf.xlu0
    %v743 = vpop.trf.xlu0
    %v744 = vpop.trf.xlu0
    %v745 = vpop.trf.xlu0
    %v746 = vpop.trf.xlu0
    %v747 = vpop.trf.xlu0
    %v748 = vpop.trf.xlu0
    %v749 = vpop.trf.xlu0
    %v750 = vpop.trf.xlu0
    %v751 = vpop.trf.xlu0
    %v752 = vpop.trf.xlu0
    %v753 = vpop.trf.xlu0
    %v754 = vld [vmem:[%s7] sm:$0xff]
    %v755 = vld [vmem:[%s7 + $0x8] sm:$0xff]
    %v756 = vld [vmem:[%s7 + $0x10] sm:$0xff]
    %v757 = vld [vmem:[%s7 + $0x18] sm:$0xff]
    %759 = vset.pattern.permute.xlu0 0
    %760 = vperm.xlu0 %759, %v754
    %v761 = vpop.permute.xlu0 %760
    %764 = vset.pattern.permute.xlu0 0
    %765 = vperm.xlu0 %764, %v755
    %v766 = vpop.permute.xlu0 %765
    %769 = vset.pattern.permute.xlu0 0
    %770 = vperm.xlu0 %769, %v756
    %v771 = vpop.permute.xlu0 %770
    %774 = vset.pattern.permute.xlu0 0
    %775 = vperm.xlu0 %774, %v757
    %v776 = vpop.permute.xlu0 %775
    %v778 = vmul.f32 %v738, %v761
    %v779 = vmul.f32 %v739, %v766
    %v780 = vmul.f32 %v740, %v771
    %v781 = vmul.f32 %v741, %v776
    %v782 = vadd.f32 %v778, %v779
    %v783 = vadd.f32 %v782, %v780
    %v784 = vadd.f32 %v783, %v781
    %v785 = vrot.slane %v784, 4
    %v786 = vadd.f32 %v784, %v785
    %v787 = vrot.slane %v786, 2
    %v788 = vadd.f32 %v786, %v787
    %v789 = vrot.slane %v788, 1
    %v790 = vadd.f32 %v788, %v789
    %v791 = vld [vmem:[#allocation2] sm:$0x1]
    %793 = vset.pattern.permute.xlu0 0
    %794 = vperm.xlu0 %793, %v791
    %v795 = vpop.permute.xlu0 %794
    %v797 = vlaneseq
    %v798 = vshrl.u32 %v797, 7
    %v799 = vsub.s32 0, %v798
    %v800 = vrot.slane %v795, %v799
    %v801 = vadd.f32 %v790, %v800
    %v802 = vxor.u32 %v801, 2147483648
    %v803 = vmul.f32 %v802, 1.442695
    %v804 = vpow.pop %v803
    %v805 = vadd.f32 %v804, 1.0
    %v806 = vrcp.pop %v805
    %v807 = vmul.f32 1.0, %v806
    %808 = vst [vmem:[#allocation3] sm:$0x1] %v807
    // Predicated region
    $region38: #{tpu_custom_call.1} parent=1 // pred_check
      _
    $region39: #{tpu_custom_call.1} parent=1 // pred_check_branch
      %810 = sbr.rel (0) target = $region41
    $region40: #{tpu_custom_call.1} parent=1 // pred_region
      %s812 = ssub.s32 16, 16
      %813 = vsyncadd [#allocation4], %s812
      %s815 = sshll.u32 [#allocation3], 4
      %s816 = int_to_ptr.vmem [resolvable:$true] %s815
      %818 = dma.vmem_to_hbm [thread:$0]  %s816, 16, %s9, [#allocation4]
    $region41: #{tpu_custom_call.1} parent=1 // pred_fallthru
      _
    // Predicated region
    $region42: #{tpu_custom_call.1} parent=1 // pred_check
      _
    $region43: #{tpu_custom_call.1} parent=1 // pred_check_branch
      %820 = sbr.rel (0) target = $region45
    $region44: #{tpu_custom_call.1} parent=1 // pred_region
      %821 = dma.done [#allocation4], 16
    $region45: #{tpu_custom_call.1} parent=1 // pred_fallthru
      _
    %822 = vsyncpa [#allocation4], 1

</llo_original>
